<compile_context>
chip_gen: v5e
topology: v5e:2x2
jax: 0.10.0
libtpu: 0.0.40
codegen_flags: <defaults>
</compile_context>

<pallas_src>
import math

import numpy as np
import jax
import jax.numpy as jnp
from jax import lax
from jax.experimental import pallas as pl
from jax.experimental.pallas import tpu as pltpu

LN2 = math.log(2.0)

# ---------------- model hyper-parameters (module __init__) ----------------
NUM_INTERACTIONS = 2
HIDDEN = 32                                      # hidden_state_size
CUTOFF = 5.0
GAUSS_STEP = 0.1                                 # gaussian_expansion_step
EDGE_SIZE = int(math.ceil(CUTOFF / GAUSS_STEP))  # 50 gaussian features
EDGE_PAD = 64                                    # lane-friendly padded width
HALF_HIDDEN = int(math.ceil(HIDDEN / 2))         # 16
NUM_EMBEDDINGS = 119
EMB_PAD = 128                                    # lane-padded embedding one-hot width
OUT_DIM = 6
OUT_LANES = 128                                  # lane-dense readout slab width
B_PAD = 8                                        # sublane-padded batch rows
# Edges streamed per grid step.  Must be a multiple of 128 (lane dim of the
# receiver one-hot tile).  For real graphs choose the largest tile whose
# 2-deep double buffers (2 * 2 * EDGE_TILE * n_pad * 2 B) stay under ~40-48 MiB
# on v7x (64 MiB physical VMEM); v5e/v6e can take ~2x larger tiles.
EDGE_TILE = 128


def _ssp(x):
    """ShiftedSoftplus: softplus(x) - log(2), numerically stable (VPU/EUP)."""
    return jnp.maximum(x, 0.0) + jnp.log(1.0 + jnp.exp(-jnp.abs(x))) - LN2


# ------------------------------ fused Pallas kernel ------------------------------
def schnet_fused_kernel(
        dist_ref, send_ref, recvt_ref, emb_oh_ref, emb_w_ref,
        nb_oh_ref, nb_coords_ref, seg_ref, ab_ref,
        wn1_ref, bn1_ref, wn2_ref, bn2_ref,
        we1_ref, be1_ref, we2_ref, be2_ref,
        ws1_ref, bs1_ref, ws2_ref, bs2_ref,
        w1h_ref, w1c_ref, b1r_ref, w2h_ref, w2ab_ref, b2r_ref,
        out_ref,
        nodes_scr, msg_node_scr, msg_sum_scr):
    f32 = jnp.float32
    bf16 = jnp.bfloat16

    layer = pl.program_id(0)
    etile = pl.program_id(1)
    n_etiles = pl.num_programs(1)
    last_layer = pl.num_programs(0) - 1

    # --- once at grid start: atom embedding lookup (exact one-hot, f32) ---
    # TODO(synk): replace with a scalar-prefetched index gather from the
    # VMEM-resident [128, H] table to drop the [N,128] one-hot HBM input.
    @pl.when(jnp.logical_and(layer == 0, etile == 0))
    def _():
        nodes_scr[...] = jnp.dot(emb_oh_ref[...], emb_w_ref[...],
                                 preferred_element_type=f32)           # [N, H]

    # --- once per layer (first edge tile): per-node message MLP, reset acc ---
    @pl.when(etile == 0)
    def _():
        nodes_bf = nodes_scr[...].astype(bf16)
        hn = _ssp(jnp.dot(nodes_bf, wn1_ref[0],
                          preferred_element_type=f32) + bn1_ref[0])    # [N, H]
        msg_node_scr[...] = (jnp.dot(hn.astype(bf16), wn2_ref[0],
                                     preferred_element_type=f32) + bn2_ref[0])
        msg_sum_scr[...] = jnp.zeros_like(msg_sum_scr)

    # --- per edge tile: gaussian expansion + edge gates + gather + scatter-add ---
    d = dist_ref[...]                                                  # [TE, 1] f32
    mu = GAUSS_STEP * lax.broadcasted_iota(
        jnp.int32, (d.shape[0], EDGE_PAD), 1).astype(f32)
    diff = d - mu
    edge_state = jnp.exp(diff * diff *
                         (-1.0 / (2.0 * GAUSS_STEP * GAUSS_STEP)))     # [TE, 64]

    he = _ssp(jnp.dot(edge_state.astype(bf16), we1_ref[0],
                      preferred_element_type=f32) + be1_ref[0])        # [TE, H]
    gates = jnp.dot(he.astype(bf16), we2_ref[0],
                    preferred_element_type=f32) + be2_ref[0]           # [TE, H]

    # sender gather == exact one-hot matmul (msg MLP already applied per node)
    # TODO(synk): for very large N, switch to an index-based row gather of
    # msg_node_scr to avoid the O(TE*N*H) one-hot MACs.
    msg_node = jnp.dot(send_ref[...], msg_node_scr[...].astype(bf16),
                       preferred_element_type=f32)                     # [TE, H]
    messages = msg_node * gates                                        # [TE, H]

    # index_add_ over receivers == one-hot^T matmul (reduction on the MXU);
    # pad-edge columns of recv_oh_t are zero so pad edges contribute nothing.
    msg_sum_scr[...] += jnp.dot(recvt_ref[...], messages.astype(bf16),
                                preferred_element_type=f32)            # [N, H]

    # --- last edge tile of a layer: state transition + residual update ---
    @pl.when(etile == n_etiles - 1)
    def _():
        hs = _ssp(jnp.dot(msg_sum_scr[...].astype(bf16), ws1_ref[0],
                          preferred_element_type=f32) + bs1_ref[0])
        upd = jnp.dot(hs.astype(bf16), ws2_ref[0],
                      preferred_element_type=f32) + bs2_ref[0]
        nodes_scr[...] = nodes_scr[...] + upd

    # --- very last grid point: readout (neighbor gather, mlp_c_half, per-graph
    #     sum, readout_mlp).  Small-K (3 / 2 wide) contractions are broadcast
    #     MACs in f32 to keep coordinate / A,B-distance precision. ---
    @pl.when(jnp.logical_and(layer == last_layer, etile == n_etiles - 1))
    def _():
        nodes = nodes_scr[...]
        nb_states = jnp.dot(nb_oh_ref[...], nodes,
                            preferred_element_type=f32)                # [BN, H] f32
        coords = nb_coords_ref[...]                                    # [BN, 3] f32
        w1c = w1c_ref[...]                                             # [3, Hh] f32
        coord_term = (coords[:, 0:1] * w1c[0:1, :]
                      + coords[:, 1:2] * w1c[1:2, :]
                      + coords[:, 2:3] * w1c[2:3, :])                  # [BN, Hh]
        h = _ssp(jnp.dot(nb_states.astype(bf16), w1h_ref[...],
                         preferred_element_type=f32)
                 + coord_term + b1r_ref[...])                          # [BN, Hh]
        s = jnp.dot(seg_ref[...], h, preferred_element_type=f32)       # [B_pad, Hh]
        ab = ab_ref[...]                                               # [B_pad, 2] f32
        w2ab = w2ab_ref[...]                                           # [2, 128] f32
        ab_term = ab[:, 0:1] * w2ab[0:1, :] + ab[:, 1:2] * w2ab[1:2, :]
        out_ref[...] = (jnp.dot(s.astype(bf16), w2h_ref[...],
                                preferred_element_type=f32)
                        + ab_term + b2r_ref[...])                      # [B_pad, 128]


# ------------------------------- forward wrapper -------------------------------
@jax.jit
def schnet_forward(kp, dist, send_oh, recv_oh_t, emb_oh, nb_oh, nb_coords, seg, ab):
    e_pad = dist.shape[0]
    n_pad = send_oh.shape[1]
    bn_rows = nb_oh.shape[0]
    assert e_pad % EDGE_TILE == 0
    n_etiles = e_pad // EDGE_TILE
    grid = (NUM_INTERACTIONS, n_etiles)

    def whole(arr):  # whole-array (2-D) block, resident across the grid
        return pl.BlockSpec(tuple(arr.shape), lambda l, e: (0, 0))

    def per_layer(arr):  # [L, ...] stacked weight streamed by the layer axis
        return pl.BlockSpec((1,) + tuple(arr.shape[1:]), lambda l, e: (l, 0, 0))

    layer_names = ["wn1", "bn1", "wn2", "bn2", "we1", "be1",
                   "we2", "be2", "ws1", "bs1", "ws2", "bs2"]
    readout_names = ["w1h", "w1c", "b1r", "w2h", "w2ab", "b2r"]

    args = [dist, send_oh, recv_oh_t, emb_oh, kp["emb_w"],
            nb_oh, nb_coords, seg, ab]
    args += [kp[n] for n in layer_names]
    args += [kp[n] for n in readout_names]

    in_specs = [
        pl.BlockSpec((EDGE_TILE, 1), lambda l, e: (e, 0)),        # dist
        pl.BlockSpec((EDGE_TILE, n_pad), lambda l, e: (e, 0)),    # sender one-hot
        pl.BlockSpec((n_pad, EDGE_TILE), lambda l, e: (0, e)),    # receiver one-hot^T
        whole(emb_oh), whole(kp["emb_w"]),
        whole(nb_oh), whole(nb_coords), whole(seg), whole(ab),
    ]
    in_specs += [per_layer(kp[n]) for n in layer_names]
    in_specs += [whole(kp[n]) for n in readout_names]

    # advisory cost hint for XLA's scheduler
    L = NUM_INTERACTIONS
    flops = 2 * n_pad * EMB_PAD * HIDDEN
    flops += L * (2 * n_pad * HIDDEN * HIDDEN * 2
                  + 2 * e_pad * (EDGE_PAD + HIDDEN) * HIDDEN
                  + 2 * e_pad * n_pad * HIDDEN
                  + 2 * n_pad * e_pad * HIDDEN
                  + 2 * n_pad * HIDDEN * HIDDEN * 2)
    flops += (2 * bn_rows * n_pad * HIDDEN + 2 * bn_rows * HIDDEN * HALF_HIDDEN
              + 2 * B_PAD * bn_rows * HALF_HIDDEN
              + 2 * B_PAD * HALF_HIDDEN * OUT_LANES)
    transc = L * (e_pad * EDGE_PAD + (2 * n_pad + e_pad) * HIDDEN) \
        + bn_rows * HALF_HIDDEN
    bytes_acc = sum(int(np.prod(a.shape)) * a.dtype.itemsize for a in args)
    bytes_acc += (L - 1) * (int(np.prod(dist.shape)) * 4
                            + int(np.prod(send_oh.shape)) * 2
                            + int(np.prod(recv_oh_t.shape)) * 2)
    bytes_acc += B_PAD * OUT_LANES * 4

    # TODO(synk): the layer/edge axes carry state (node scratch) so they cannot
    # be split across v7x's 2 TensorCores; a dual-TC variant would partition
    # receivers into two disjoint halves with a cross-core reduction.
    out_slab = pl.pallas_call(
        schnet_fused_kernel,
        out_shape=jax.ShapeDtypeStruct((B_PAD, OUT_LANES), jnp.float32),
        grid=grid,
        in_specs=in_specs,
        out_specs=pl.BlockSpec((B_PAD, OUT_LANES), lambda l, e: (0, 0)),
        scratch_shapes=[pltpu.VMEM((n_pad, HIDDEN), jnp.float32),   # node state
                        pltpu.VMEM((n_pad, HIDDEN), jnp.float32),   # per-node msg MLP
                        pltpu.VMEM((n_pad, HIDDEN), jnp.float32)],  # msg_sum accumulator
        compiler_params=pltpu.CompilerParams(
            dimension_semantics=("arbitrary", "arbitrary"),
            vmem_limit_bytes=48 * 1024 * 1024),
        cost_estimate=pl.CostEstimate(flops=int(flops),
                                      transcendentals=int(transc),
                                      bytes_accessed=int(bytes_acc)),
    )(*args)
    return out_slab


# ------------------------------ parameter init ------------------------------
def _linear(key, fan_in, fan_out):
    kw, kb = jax.random.split(key)
    w = jax.random.normal(kw, (fan_in, fan_out), jnp.float32) / np.sqrt(fan_in)
    b = jax.random.normal(kb, (1, fan_out), jnp.float32) * 0.01
    return w, b


def init_params(key):
    keys = iter(jax.random.split(key, 32))
    params = {}
    params["emb"] = jax.random.normal(next(keys), (NUM_EMBEDDINGS, HIDDEN),
                                      jnp.float32) * 0.5
    inter = []
    for _ in range(NUM_INTERACTIONS):
        wn1, bn1 = _linear(next(keys), HIDDEN, HIDDEN)
        wn2, bn2 = _linear(next(keys), HIDDEN, HIDDEN)
        we1, be1 = _linear(next(keys), EDGE_SIZE, HIDDEN)
        we2, be2 = _linear(next(keys), HIDDEN, HIDDEN)
        ws1, bs1 = _linear(next(keys), HIDDEN, HIDDEN)
        ws2, bs2 = _linear(next(keys), HIDDEN, HIDDEN)
        inter.append((wn1, bn1, wn2, bn2, we1, be1, we2, be2, ws1, bs1, ws2, bs2))
    params["interactions"] = inter
    params["w1"], params["b1"] = _linear(next(keys), HIDDEN + 3, HALF_HIDDEN)
    w2, b2 = _linear(next(keys), HALF_HIDDEN + 2, OUT_DIM)
    params["w2h"] = w2[:HALF_HIDDEN]
    params["w2ab"] = w2[HALF_HIDDEN:]
    params["b2"] = b2
    return params


def prepare_kernel_params(params):
    """Cast / pad / layer-stack weights once into the kernel-ready layout:
    bf16 MXU weights, f32 biases, f32 small physically-meaningful operands."""
    bf16 = jnp.bfloat16
    f32 = jnp.float32
    kp = {}
    kp["emb_w"] = (jnp.zeros((EMB_PAD, HIDDEN), f32)
                   .at[:NUM_EMBEDDINGS].set(params["emb"]))           # f32: exact lookup

    idx = {"wn1": 0, "bn1": 1, "wn2": 2, "bn2": 3, "we1": 4, "be1": 5,
           "we2": 6, "be2": 7, "ws1": 8, "bs1": 9, "ws2": 10, "bs2": 11}
    for name, i in idx.items():
        stacked = jnp.stack([params["interactions"][l][i]
                             for l in range(NUM_INTERACTIONS)], axis=0)
        if name == "we1":                                             # pad K 50 -> 64
            stacked = (jnp.zeros((NUM_INTERACTIONS, EDGE_PAD, HIDDEN), f32)
                       .at[:, :EDGE_SIZE, :].set(stacked))
        kp[name] = stacked.astype(bf16) if name.startswith("w") else stacked

    kp["w1h"] = params["w1"][:HIDDEN].astype(bf16)                    # [32, 16]
    kp["w1c"] = params["w1"][HIDDEN:]                                 # [3, 16]  f32
    kp["b1r"] = params["b1"]                                          # [1, 16]  f32
    kp["w2h"] = (jnp.zeros((HALF_HIDDEN, OUT_LANES), f32)
                 .at[:, :OUT_DIM].set(params["w2h"]).astype(bf16))
    kp["w2ab"] = (jnp.zeros((2, OUT_LANES), f32)
                  .at[:, :OUT_DIM].set(params["w2ab"]))               # f32
    kp["b2r"] = jnp.zeros((1, OUT_LANES), f32).at[:, :OUT_DIM].set(params["b2"])
    return kp


# ----------------------------------- main ------------------------------------
if __name__ == "__main__":
    B = 2
    num_nodes = [6, 8]
    num_edges = [10, 14]
    max_nodes, max_edges = 8, 16
    max_nb = 8
    num_neighbors = [5, 7]

    k_iter = iter(jax.random.split(jax.random.PRNGKey(0), 32))

    # padded per-graph inputs (mirrors the PyTorch input_dict)
    nodes_pad = np.asarray(jax.random.randint(next(k_iter), (B, max_nodes),
                                              1, NUM_EMBEDDINGS))
    edges_pad = np.zeros((B, max_edges, 2), dtype=np.int32)
    for b in range(B):
        edges_pad[b] = np.asarray(jax.random.randint(next(k_iter),
                                                     (max_edges, 2),
                                                     0, num_nodes[b]))
    edges_feat_pad = np.asarray(jax.random.uniform(next(k_iter),
                                                   (B, max_edges, 1),
                                                   minval=0.5,
                                                   maxval=CUTOFF - 0.1))

    # --- unpad_and_cat + edge_offset (host-side glue on concrete data) ---
    edge_offset = np.concatenate([[0], np.cumsum(num_nodes)[:-1]])
    edges_global = edges_pad + edge_offset[:, None, None]
    edges_cat = np.concatenate([edges_global[b, :num_edges[b]] for b in range(B)], 0)
    dist_cat = np.concatenate([edges_feat_pad[b, :num_edges[b]] for b in range(B)], 0)
    nodes_cat = np.concatenate([nodes_pad[b, :num_nodes[b]] for b in range(B)], 0)

    n_tot, e_tot = nodes_cat.shape[0], edges_cat.shape[0]
    n_pad = int(np.ceil(n_tot / 8) * 8)
    # pad edge count to a multiple of EDGE_TILE; use >=2 tiles here so the
    # streamed-edge accumulation path of the grid is exercised
    e_pad = max(2 * EDGE_TILE, int(np.ceil(e_tot / EDGE_TILE) * EDGE_TILE))
    bn_rows = B * max_nb                       # 16 (multiple of 8)

    # correctness of the padding scheme relies on all senders/receivers and
    # neighbor ids pointing at real (non-pad) nodes
    assert np.all(edges_cat < n_tot)

    nodes_idx = np.zeros((n_pad,), np.int32)
    nodes_idx[:n_tot] = nodes_cat
    dist = np.zeros((e_pad, 1), np.float32)
    dist[:e_tot] = dist_cat

    # exact 0/1 one-hot matrices: embedding lookup, sender gather, receiver
    # scatter (pad-edge columns stay zero), neighbor gather
    emb_oh = np.zeros((n_pad, EMB_PAD), np.float32)
    emb_oh[np.arange(n_pad), nodes_idx] = 1.0
    send_oh = np.zeros((e_pad, n_pad), np.float32)
    send_oh[np.arange(e_tot), edges_cat[:, 0]] = 1.0
    recv_oh_t = np.zeros((n_pad, e_pad), np.float32)
    recv_oh_t[edges_cat[:, 1], np.arange(e_tot)] = 1.0

    # neighbor readout inputs
    nb_ids = np.asarray(jax.random.randint(next(k_iter), (B, max_nb), 0, n_tot),
                        np.int32).reshape(-1)
    nb_oh = np.zeros((bn_rows, n_pad), np.float32)
    nb_oh[np.arange(bn_rows), nb_ids] = 1.0
    nb_coords = np.asarray(jax.random.normal(next(k_iter), (B, max_nb, 3),
                                             jnp.float32)).reshape(-1, 3)
    a_dist = np.asarray(jax.random.uniform(next(k_iter), (B,)))
    b_dist = np.asarray(jax.random.uniform(next(k_iter), (B,)))
    ab = np.zeros((B_PAD, 2), np.float32)
    ab[:B] = np.stack([a_dist, b_dist], axis=1)

    # segment matrix: row b sums the first num_neighbors[b] neighbor rows of graph b
    seg = np.zeros((B_PAD, bn_rows), np.float32)
    for b in range(B):
        seg[b, b * max_nb: b * max_nb + num_neighbors[b]] = 1.0

    params = init_params(jax.random.PRNGKey(0))
    kp = prepare_kernel_params(params)

    out_slab = schnet_forward(
        kp,
        jnp.asarray(dist, jnp.float32),
        jnp.asarray(send_oh, jnp.bfloat16),
        jnp.asarray(recv_oh_t, jnp.bfloat16),
        jnp.asarray(emb_oh, jnp.float32),
        jnp.asarray(nb_oh, jnp.float32),
        jnp.asarray(nb_coords, jnp.float32),
        jnp.asarray(seg, jnp.float32),
        jnp.asarray(ab, jnp.float32),
    )
    out_slab = jax.block_until_ready(out_slab)
    out = np.asarray(out_slab)[:B, :OUT_DIM]   # slice the lane-dense slab

    assert out.shape == (B, OUT_DIM), out.shape
    assert bool(np.all(np.isfinite(out)))
    # TODO(synk): EdgeUpdate layers not implemented (update_edges=False default
    # -> identity edge update, matching the reference forward).
    print("KERNEL_OK")
</pallas_src>

<mosaic_0001>
module attributes {stable_mosaic.version = 11 : i64} {
  func.func @schnet_fused_kernel(%arg0: i32, %arg1: i32, %arg2: memref<128x1xf32, #tpu.memory_space<vmem>>, %arg3: memref<128x16xbf16, #tpu.memory_space<vmem>>, %arg4: memref<16x128xbf16, #tpu.memory_space<vmem>>, %arg5: memref<16x128xf32, #tpu.memory_space<vmem>>, %arg6: memref<128x32xf32, #tpu.memory_space<vmem>>, %arg7: memref<16x16xf32, #tpu.memory_space<vmem>>, %arg8: memref<16x3xf32, #tpu.memory_space<vmem>>, %arg9: memref<8x16xf32, #tpu.memory_space<vmem>>, %arg10: memref<8x2xf32, #tpu.memory_space<vmem>>, %arg11: memref<1x32x32xbf16, #tpu.memory_space<vmem>>, %arg12: memref<1x1x32xf32, #tpu.memory_space<vmem>>, %arg13: memref<1x32x32xbf16, #tpu.memory_space<vmem>>, %arg14: memref<1x1x32xf32, #tpu.memory_space<vmem>>, %arg15: memref<1x64x32xbf16, #tpu.memory_space<vmem>>, %arg16: memref<1x1x32xf32, #tpu.memory_space<vmem>>, %arg17: memref<1x32x32xbf16, #tpu.memory_space<vmem>>, %arg18: memref<1x1x32xf32, #tpu.memory_space<vmem>>, %arg19: memref<1x32x32xbf16, #tpu.memory_space<vmem>>, %arg20: memref<1x1x32xf32, #tpu.memory_space<vmem>>, %arg21: memref<1x32x32xbf16, #tpu.memory_space<vmem>>, %arg22: memref<1x1x32xf32, #tpu.memory_space<vmem>>, %arg23: memref<32x16xbf16, #tpu.memory_space<vmem>>, %arg24: memref<3x16xf32, #tpu.memory_space<vmem>>, %arg25: memref<1x16xf32, #tpu.memory_space<vmem>>, %arg26: memref<16x128xbf16, #tpu.memory_space<vmem>>, %arg27: memref<2x128xf32, #tpu.memory_space<vmem>>, %arg28: memref<1x128xf32, #tpu.memory_space<vmem>>, %arg29: memref<8x128xf32, #tpu.memory_space<vmem>>, %arg30: memref<16x32xf32, #tpu.memory_space<vmem>>, %arg31: memref<16x32xf32, #tpu.memory_space<vmem>>, %arg32: memref<16x32xf32, #tpu.memory_space<vmem>>) attributes {dimension_semantics = [#tpu.dimension_semantics<arbitrary>, #tpu.dimension_semantics<arbitrary>], iteration_bounds = array<i64: 2, 2>, scalar_prefetch = 0 : i64, scratch_operands = 3 : i64, tpu.core_type = #tpu.core_type<tc>, window_params = [{transform_indices = @transform_0, window_bounds = array<i64: 128, 1>}, {transform_indices = @transform_1, window_bounds = array<i64: 128, 16>}, {transform_indices = @transform_2, window_bounds = array<i64: 16, 128>}, {pipeline_mode = #tpu.pipeline_mode<synchronous>, transform_indices = @transform_3, window_bounds = array<i64: 16, 128>}, {pipeline_mode = #tpu.pipeline_mode<synchronous>, transform_indices = @transform_4, window_bounds = array<i64: 128, 32>}, {pipeline_mode = #tpu.pipeline_mode<synchronous>, transform_indices = @transform_5, window_bounds = array<i64: 16, 16>}, {pipeline_mode = #tpu.pipeline_mode<synchronous>, transform_indices = @transform_6, window_bounds = array<i64: 16, 3>}, {pipeline_mode = #tpu.pipeline_mode<synchronous>, transform_indices = @transform_7, window_bounds = array<i64: 8, 16>}, {pipeline_mode = #tpu.pipeline_mode<synchronous>, transform_indices = @transform_8, window_bounds = array<i64: 8, 2>}, {transform_indices = @transform_9, window_bounds = array<i64: 1, 32, 32>}, {transform_indices = @transform_10, window_bounds = array<i64: 1, 1, 32>}, {transform_indices = @transform_11, window_bounds = array<i64: 1, 32, 32>}, {transform_indices = @transform_12, window_bounds = array<i64: 1, 1, 32>}, {transform_indices = @transform_13, window_bounds = array<i64: 1, 64, 32>}, {transform_indices = @transform_14, window_bounds = array<i64: 1, 1, 32>}, {transform_indices = @transform_15, window_bounds = array<i64: 1, 32, 32>}, {transform_indices = @transform_16, window_bounds = array<i64: 1, 1, 32>}, {transform_indices = @transform_17, window_bounds = array<i64: 1, 32, 32>}, {transform_indices = @transform_18, window_bounds = array<i64: 1, 1, 32>}, {transform_indices = @transform_19, window_bounds = array<i64: 1, 32, 32>}, {transform_indices = @transform_20, window_bounds = array<i64: 1, 1, 32>}, {pipeline_mode = #tpu.pipeline_mode<synchronous>, transform_indices = @transform_21, window_bounds = array<i64: 32, 16>}, {pipeline_mode = #tpu.pipeline_mode<synchronous>, transform_indices = @transform_22, window_bounds = array<i64: 3, 16>}, {pipeline_mode = #tpu.pipeline_mode<synchronous>, transform_indices = @transform_23, window_bounds = array<i64: 1, 16>}, {pipeline_mode = #tpu.pipeline_mode<synchronous>, transform_indices = @transform_24, window_bounds = array<i64: 16, 128>}, {pipeline_mode = #tpu.pipeline_mode<synchronous>, transform_indices = @transform_25, window_bounds = array<i64: 2, 128>}, {pipeline_mode = #tpu.pipeline_mode<synchronous>, transform_indices = @transform_26, window_bounds = array<i64: 1, 128>}, {pipeline_mode = #tpu.pipeline_mode<synchronous>, transform_indices = @transform_27, window_bounds = array<i64: 8, 128>}]} {
    %c0_i32 = arith.constant 0 : i32
    %0 = arith.cmpi eq, %arg0, %c0_i32 : i32
    %c0_i32_0 = arith.constant 0 : i32
    %1 = arith.cmpi eq, %arg1, %c0_i32_0 : i32
    %2 = arith.andi %0, %1 : i1
    %3 = arith.extui %2 : i1 to i32
    %c0_i32_1 = arith.constant 0 : i32
    %4 = arith.cmpi ne, %3, %c0_i32_1 : i32
    scf.if %4 {
      %c0_40 = arith.constant 0 : index
      %c0_41 = arith.constant 0 : index
      %66 = vector.load %arg5[%c0_40, %c0_41] : memref<16x128xf32, #tpu.memory_space<vmem>>, vector<16x128xf32>
      %c0_42 = arith.constant 0 : index
      %c0_43 = arith.constant 0 : index
      %67 = vector.load %arg6[%c0_42, %c0_43] : memref<128x32xf32, #tpu.memory_space<vmem>>, vector<128x32xf32>
      %cst_44 = arith.constant dense<0.000000e+00> : vector<16x32xf32>
      %68 = tpu.matmul %66, %67, %cst_44 {dimension_numbers = #tpu.dot_dimension_numbers<[1], [0], [0], [1], [0, 0, 1, 1], [], []>} : vector<16x128xf32>, vector<128x32xf32>, vector<16x32xf32> -> vector<16x32xf32>
      %c0_45 = arith.constant 0 : index
      %c0_46 = arith.constant 0 : index
      %69 = vector.load %arg30[%c0_45, %c0_46] : memref<16x32xf32, #tpu.memory_space<vmem>>, vector<16x32xf32>
      tpu.vector_store %arg30[%c0_45, %c0_46], %68 {strides = array<i32>} : memref<16x32xf32, #tpu.memory_space<vmem>>, vector<16x32xf32>,
    } else {
    }
    %c0_i32_2 = arith.constant 0 : i32
    %5 = arith.cmpi eq, %arg1, %c0_i32_2 : i32
    %6 = arith.extui %5 : i1 to i32
    %c0_i32_3 = arith.constant 0 : i32
    %7 = arith.cmpi ne, %6, %c0_i32_3 : i32
    scf.if %7 {
      %c0_40 = arith.constant 0 : index
      %c0_41 = arith.constant 0 : index
      %66 = vector.load %arg30[%c0_40, %c0_41] : memref<16x32xf32, #tpu.memory_space<vmem>>, vector<16x32xf32>
      %67 = arith.truncf %66 : vector<16x32xf32> to vector<16x32xbf16>
      %c0_42 = arith.constant 0 : index
      %c0_43 = arith.constant 0 : index
      %c0_44 = arith.constant 0 : index
      %68 = vector.load %arg11[%c0_42, %c0_43, %c0_44] : memref<1x32x32xbf16, #tpu.memory_space<vmem>>, vector<1x32x32xbf16>
      %69 = vector.shape_cast %68 : vector<1x32x32xbf16> to vector<32x32xbf16>
      %cst_45 = arith.constant dense<0.000000e+00> : vector<16x32xf32>
      %70 = tpu.matmul %67, %69, %cst_45 {dimension_numbers = #tpu.dot_dimension_numbers<[1], [0], [0], [1], [0, 0, 1, 1], [], []>} : vector<16x32xbf16>, vector<32x32xbf16>, vector<16x32xf32> -> vector<16x32xf32>
      %c0_46 = arith.constant 0 : index
      %c0_47 = arith.constant 0 : index
      %c0_48 = arith.constant 0 : index
      %71 = vector.load %arg12[%c0_46, %c0_47, %c0_48] : memref<1x1x32xf32, #tpu.memory_space<vmem>>, vector<1x1x32xf32>
      %72 = vector.shape_cast %71 : vector<1x1x32xf32> to vector<1x32xf32>
      %73 = vector.broadcast %72 : vector<1x32xf32> to vector<16x32xf32>
      %74 = arith.addf %70, %73 : vector<16x32xf32>
      %cst_49 = arith.constant 0.000000e+00 : f32
      %75 = vector.broadcast %cst_49 : f32 to vector<16x32xf32>
      %76 = arith.maximumf %74, %75 : vector<16x32xf32>
      %77 = math.absf %74 : vector<16x32xf32>
      %cst_50 = arith.constant 0.000000e+00 : f32
      %78 = vector.broadcast %cst_50 : f32 to vector<16x32xf32>
      %79 = arith.subf %78, %77 : vector<16x32xf32>
      %80 = math.exp %79 : vector<16x32xf32>
      %cst_51 = arith.constant 1.000000e+00 : f32
      %81 = vector.broadcast %cst_51 : f32 to vector<16x32xf32>
      %82 = arith.addf %81, %80 : vector<16x32xf32>
      %83 = math.log %82 : vector<16x32xf32>
      %84 = arith.addf %76, %83 : vector<16x32xf32>
      %cst_52 = arith.constant 0.693147182 : f32
      %85 = vector.broadcast %cst_52 : f32 to vector<16x32xf32>
      %86 = arith.subf %84, %85 : vector<16x32xf32>
      %87 = arith.truncf %86 : vector<16x32xf32> to vector<16x32xbf16>
      %c0_53 = arith.constant 0 : index
      %c0_54 = arith.constant 0 : index
      %c0_55 = arith.constant 0 : index
      %88 = vector.load %arg13[%c0_53, %c0_54, %c0_55] : memref<1x32x32xbf16, #tpu.memory_space<vmem>>, vector<1x32x32xbf16>
      %89 = vector.shape_cast %88 : vector<1x32x32xbf16> to vector<32x32xbf16>
      %cst_56 = arith.constant dense<0.000000e+00> : vector<16x32xf32>
      %90 = tpu.matmul %87, %89, %cst_56 {dimension_numbers = #tpu.dot_dimension_numbers<[1], [0], [0], [1], [0, 0, 1, 1], [], []>} : vector<16x32xbf16>, vector<32x32xbf16>, vector<16x32xf32> -> vector<16x32xf32>
      %c0_57 = arith.constant 0 : index
      %c0_58 = arith.constant 0 : index
      %c0_59 = arith.constant 0 : index
      %91 = vector.load %arg14[%c0_57, %c0_58, %c0_59] : memref<1x1x32xf32, #tpu.memory_space<vmem>>, vector<1x1x32xf32>
      %92 = vector.shape_cast %91 : vector<1x1x32xf32> to vector<1x32xf32>
      %93 = vector.broadcast %92 : vector<1x32xf32> to vector<16x32xf32>
      %94 = arith.addf %90, %93 : vector<16x32xf32>
      %c0_60 = arith.constant 0 : index
      %c0_61 = arith.constant 0 : index
      %95 = vector.load %arg31[%c0_60, %c0_61] : memref<16x32xf32, #tpu.memory_space<vmem>>, vector<16x32xf32>
      tpu.vector_store %arg31[%c0_60, %c0_61], %94 {strides = array<i32>} : memref<16x32xf32, #tpu.memory_space<vmem>>, vector<16x32xf32>,
      %cst_62 = arith.constant 0.000000e+00 : f32
      %96 = vector.broadcast %cst_62 : f32 to vector<16x32xf32>
      %c0_63 = arith.constant 0 : index
      %c0_64 = arith.constant 0 : index
      %97 = vector.load %arg32[%c0_63, %c0_64] : memref<16x32xf32, #tpu.memory_space<vmem>>, vector<16x32xf32>
      tpu.vector_store %arg32[%c0_63, %c0_64], %96 {strides = array<i32>} : memref<16x32xf32, #tpu.memory_space<vmem>>, vector<16x32xf32>,
    } else {
    }
    %c0 = arith.constant 0 : index
    %c0_4 = arith.constant 0 : index
    %8 = vector.load %arg2[%c0, %c0_4] : memref<128x1xf32, #tpu.memory_space<vmem>>, vector<128x1xf32>
    %9 = tpu.iota {dimensions = array<i32: 1>} : vector<128x64xi32>
    %10 = arith.sitofp %9 : vector<128x64xi32> to vector<128x64xf32>
    %cst = arith.constant 1.000000e-01 : f32
    %11 = vector.broadcast %cst : f32 to vector<128x64xf32>
    %12 = arith.mulf %11, %10 : vector<128x64xf32>
    %13 = vector.broadcast %8 : vector<128x1xf32> to vector<128x64xf32>
    %14 = arith.subf %13, %12 : vector<128x64xf32>
    %15 = arith.mulf %14, %14 : vector<128x64xf32>
    %cst_5 = arith.constant -5.000000e+01 : f32
    %16 = vector.broadcast %cst_5 : f32 to vector<128x64xf32>
    %17 = arith.mulf %15, %16 : vector<128x64xf32>
    %18 = math.exp %17 : vector<128x64xf32>
    %19 = arith.truncf %18 : vector<128x64xf32> to vector<128x64xbf16>
    %c0_6 = arith.constant 0 : index
    %c0_7 = arith.constant 0 : index
    %c0_8 = arith.constant 0 : index
    %20 = vector.load %arg15[%c0_6, %c0_7, %c0_8] : memref<1x64x32xbf16, #tpu.memory_space<vmem>>, vector<1x64x32xbf16>
    %21 = vector.shape_cast %20 : vector<1x64x32xbf16> to vector<64x32xbf16>
    %cst_9 = arith.constant dense<0.000000e+00> : vector<128x32xf32>
    %22 = tpu.matmul %19, %21, %cst_9 {dimension_numbers = #tpu.dot_dimension_numbers<[1], [0], [0], [1], [0, 0, 1, 1], [], []>} : vector<128x64xbf16>, vector<64x32xbf16>, vector<128x32xf32> -> vector<128x32xf32>
    %c0_10 = arith.constant 0 : index
    %c0_11 = arith.constant 0 : index
    %c0_12 = arith.constant 0 : index
    %23 = vector.load %arg16[%c0_10, %c0_11, %c0_12] : memref<1x1x32xf32, #tpu.memory_space<vmem>>, vector<1x1x32xf32>
    %24 = vector.shape_cast %23 : vector<1x1x32xf32> to vector<1x32xf32>
    %25 = vector.broadcast %24 : vector<1x32xf32> to vector<128x32xf32>
    %26 = arith.addf %22, %25 : vector<128x32xf32>
    %cst_13 = arith.constant 0.000000e+00 : f32
    %27 = vector.broadcast %cst_13 : f32 to vector<128x32xf32>
    %28 = arith.maximumf %26, %27 : vector<128x32xf32>
    %29 = math.absf %26 : vector<128x32xf32>
    %cst_14 = arith.constant 0.000000e+00 : f32
    %30 = vector.broadcast %cst_14 : f32 to vector<128x32xf32>
    %31 = arith.subf %30, %29 : vector<128x32xf32>
    %32 = math.exp %31 : vector<128x32xf32>
    %cst_15 = arith.constant 1.000000e+00 : f32
    %33 = vector.broadcast %cst_15 : f32 to vector<128x32xf32>
    %34 = arith.addf %33, %32 : vector<128x32xf32>
    %35 = math.log %34 : vector<128x32xf32>
    %36 = arith.addf %28, %35 : vector<128x32xf32>
    %cst_16 = arith.constant 0.693147182 : f32
    %37 = vector.broadcast %cst_16 : f32 to vector<128x32xf32>
    %38 = arith.subf %36, %37 : vector<128x32xf32>
    %39 = arith.truncf %38 : vector<128x32xf32> to vector<128x32xbf16>
    %c0_17 = arith.constant 0 : index
    %c0_18 = arith.constant 0 : index
    %c0_19 = arith.constant 0 : index
    %40 = vector.load %arg17[%c0_17, %c0_18, %c0_19] : memref<1x32x32xbf16, #tpu.memory_space<vmem>>, vector<1x32x32xbf16>
    %41 = vector.shape_cast %40 : vector<1x32x32xbf16> to vector<32x32xbf16>
    %cst_20 = arith.constant dense<0.000000e+00> : vector<128x32xf32>
    %42 = tpu.matmul %39, %41, %cst_20 {dimension_numbers = #tpu.dot_dimension_numbers<[1], [0], [0], [1], [0, 0, 1, 1], [], []>} : vector<128x32xbf16>, vector<32x32xbf16>, vector<128x32xf32> -> vector<128x32xf32>
    %c0_21 = arith.constant 0 : index
    %c0_22 = arith.constant 0 : index
    %c0_23 = arith.constant 0 : index
    %43 = vector.load %arg18[%c0_21, %c0_22, %c0_23] : memref<1x1x32xf32, #tpu.memory_space<vmem>>, vector<1x1x32xf32>
    %44 = vector.shape_cast %43 : vector<1x1x32xf32> to vector<1x32xf32>
    %45 = vector.broadcast %44 : vector<1x32xf32> to vector<128x32xf32>
    %46 = arith.addf %42, %45 : vector<128x32xf32>
    %c0_24 = arith.constant 0 : index
    %c0_25 = arith.constant 0 : index
    %47 = vector.load %arg3[%c0_24, %c0_25] : memref<128x16xbf16, #tpu.memory_space<vmem>>, vector<128x16xbf16>
    %c0_26 = arith.constant 0 : index
    %c0_27 = arith.constant 0 : index
    %48 = vector.load %arg31[%c0_26, %c0_27] : memref<16x32xf32, #tpu.memory_space<vmem>>, vector<16x32xf32>
    %49 = arith.truncf %48 : vector<16x32xf32> to vector<16x32xbf16>
    %cst_28 = arith.constant dense<0.000000e+00> : vector<128x32xf32>
    %50 = tpu.matmul %47, %49, %cst_28 {dimension_numbers = #tpu.dot_dimension_numbers<[1], [0], [0], [1], [0, 0, 1, 1], [], []>} : vector<128x16xbf16>, vector<16x32xbf16>, vector<128x32xf32> -> vector<128x32xf32>
    %51 = arith.mulf %50, %46 : vector<128x32xf32>
    %c0_29 = arith.constant 0 : index
    %c0_30 = arith.constant 0 : index
    %52 = vector.load %arg32[%c0_29, %c0_30] : memref<16x32xf32, #tpu.memory_space<vmem>>, vector<16x32xf32>
    %c0_31 = arith.constant 0 : index
    %c0_32 = arith.constant 0 : index
    %53 = vector.load %arg4[%c0_31, %c0_32] : memref<16x128xbf16, #tpu.memory_space<vmem>>, vector<16x128xbf16>
    %54 = arith.truncf %51 : vector<128x32xf32> to vector<128x32xbf16>
    %cst_33 = arith.constant dense<0.000000e+00> : vector<16x32xf32>
    %55 = tpu.matmul %53, %54, %cst_33 {dimension_numbers = #tpu.dot_dimension_numbers<[1], [0], [0], [1], [0, 0, 1, 1], [], []>} : vector<16x128xbf16>, vector<128x32xbf16>, vector<16x32xf32> -> vector<16x32xf32>
    %56 = arith.addf %52, %55 : vector<16x32xf32>
    %c0_34 = arith.constant 0 : index
    %c0_35 = arith.constant 0 : index
    %57 = vector.load %arg32[%c0_34, %c0_35] : memref<16x32xf32, #tpu.memory_space<vmem>>, vector<16x32xf32>
    tpu.vector_store %arg32[%c0_34, %c0_35], %56 {strides = array<i32>} : memref<16x32xf32, #tpu.memory_space<vmem>>, vector<16x32xf32>,
    %c1_i32 = arith.constant 1 : i32
    %58 = arith.cmpi eq, %arg1, %c1_i32 : i32
    %59 = arith.extui %58 : i1 to i32
    %c0_i32_36 = arith.constant 0 : i32
    %60 = arith.cmpi ne, %59, %c0_i32_36 : i32
    scf.if %60 {
      %c0_40 = arith.constant 0 : index
      %c0_41 = arith.constant 0 : index
      %66 = vector.load %arg32[%c0_40, %c0_41] : memref<16x32xf32, #tpu.memory_space<vmem>>, vector<16x32xf32>
      %67 = arith.truncf %66 : vector<16x32xf32> to vector<16x32xbf16>
      %c0_42 = arith.constant 0 : index
      %c0_43 = arith.constant 0 : index
      %c0_44 = arith.constant 0 : index
      %68 = vector.load %arg19[%c0_42, %c0_43, %c0_44] : memref<1x32x32xbf16, #tpu.memory_space<vmem>>, vector<1x32x32xbf16>
      %69 = vector.shape_cast %68 : vector<1x32x32xbf16> to vector<32x32xbf16>
      %cst_45 = arith.constant dense<0.000000e+00> : vector<16x32xf32>
      %70 = tpu.matmul %67, %69, %cst_45 {dimension_numbers = #tpu.dot_dimension_numbers<[1], [0], [0], [1], [0, 0, 1, 1], [], []>} : vector<16x32xbf16>, vector<32x32xbf16>, vector<16x32xf32> -> vector<16x32xf32>
      %c0_46 = arith.constant 0 : index
      %c0_47 = arith.constant 0 : index
      %c0_48 = arith.constant 0 : index
      %71 = vector.load %arg20[%c0_46, %c0_47, %c0_48] : memref<1x1x32xf32, #tpu.memory_space<vmem>>, vector<1x1x32xf32>
      %72 = vector.shape_cast %71 : vector<1x1x32xf32> to vector<1x32xf32>
      %73 = vector.broadcast %72 : vector<1x32xf32> to vector<16x32xf32>
      %74 = arith.addf %70, %73 : vector<16x32xf32>
      %cst_49 = arith.constant 0.000000e+00 : f32
      %75 = vector.broadcast %cst_49 : f32 to vector<16x32xf32>
      %76 = arith.maximumf %74, %75 : vector<16x32xf32>
      %77 = math.absf %74 : vector<16x32xf32>
      %cst_50 = arith.constant 0.000000e+00 : f32
      %78 = vector.broadcast %cst_50 : f32 to vector<16x32xf32>
      %79 = arith.subf %78, %77 : vector<16x32xf32>
      %80 = math.exp %79 : vector<16x32xf32>
      %cst_51 = arith.constant 1.000000e+00 : f32
      %81 = vector.broadcast %cst_51 : f32 to vector<16x32xf32>
      %82 = arith.addf %81, %80 : vector<16x32xf32>
      %83 = math.log %82 : vector<16x32xf32>
      %84 = arith.addf %76, %83 : vector<16x32xf32>
      %cst_52 = arith.constant 0.693147182 : f32
      %85 = vector.broadcast %cst_52 : f32 to vector<16x32xf32>
      %86 = arith.subf %84, %85 : vector<16x32xf32>
      %87 = arith.truncf %86 : vector<16x32xf32> to vector<16x32xbf16>
      %c0_53 = arith.constant 0 : index
      %c0_54 = arith.constant 0 : index
      %c0_55 = arith.constant 0 : index
      %88 = vector.load %arg21[%c0_53, %c0_54, %c0_55] : memref<1x32x32xbf16, #tpu.memory_space<vmem>>, vector<1x32x32xbf16>
      %89 = vector.shape_cast %88 : vector<1x32x32xbf16> to vector<32x32xbf16>
      %cst_56 = arith.constant dense<0.000000e+00> : vector<16x32xf32>
      %90 = tpu.matmul %87, %89, %cst_56 {dimension_numbers = #tpu.dot_dimension_numbers<[1], [0], [0], [1], [0, 0, 1, 1], [], []>} : vector<16x32xbf16>, vector<32x32xbf16>, vector<16x32xf32> -> vector<16x32xf32>
      %c0_57 = arith.constant 0 : index
      %c0_58 = arith.constant 0 : index
      %c0_59 = arith.constant 0 : index
      %91 = vector.load %arg22[%c0_57, %c0_58, %c0_59] : memref<1x1x32xf32, #tpu.memory_space<vmem>>, vector<1x1x32xf32>
      %92 = vector.shape_cast %91 : vector<1x1x32xf32> to vector<1x32xf32>
      %93 = vector.broadcast %92 : vector<1x32xf32> to vector<16x32xf32>
      %94 = arith.addf %90, %93 : vector<16x32xf32>
      %c0_60 = arith.constant 0 : index
      %c0_61 = arith.constant 0 : index
      %95 = vector.load %arg30[%c0_60, %c0_61] : memref<16x32xf32, #tpu.memory_space<vmem>>, vector<16x32xf32>
      %96 = arith.addf %95, %94 : vector<16x32xf32>
      %c0_62 = arith.constant 0 : index
      %c0_63 = arith.constant 0 : index
      %97 = vector.load %arg30[%c0_62, %c0_63] : memref<16x32xf32, #tpu.memory_space<vmem>>, vector<16x32xf32>
      tpu.vector_store %arg30[%c0_62, %c0_63], %96 {strides = array<i32>} : memref<16x32xf32, #tpu.memory_space<vmem>>, vector<16x32xf32>,
    } else {
    }
    %c1_i32_37 = arith.constant 1 : i32
    %61 = arith.cmpi eq, %arg0, %c1_i32_37 : i32
    %c1_i32_38 = arith.constant 1 : i32
    %62 = arith.cmpi eq, %arg1, %c1_i32_38 : i32
    %63 = arith.andi %61, %62 : i1
    %64 = arith.extui %63 : i1 to i32
    %c0_i32_39 = arith.constant 0 : i32
    %65 = arith.cmpi ne, %64, %c0_i32_39 : i32
    scf.if %65 {
      %c0_40 = arith.constant 0 : index
      %c0_41 = arith.constant 0 : index
      %66 = vector.load %arg30[%c0_40, %c0_41] : memref<16x32xf32, #tpu.memory_space<vmem>>, vector<16x32xf32>
      %c0_42 = arith.constant 0 : index
      %c0_43 = arith.constant 0 : index
      %67 = vector.load %arg7[%c0_42, %c0_43] : memref<16x16xf32, #tpu.memory_space<vmem>>, vector<16x16xf32>
      %cst_44 = arith.constant dense<0.000000e+00> : vector<16x32xf32>
      %68 = tpu.matmul %67, %66, %cst_44 {dimension_numbers = #tpu.dot_dimension_numbers<[1], [0], [0], [1], [0, 0, 1, 1], [], []>} : vector<16x16xf32>, vector<16x32xf32>, vector<16x32xf32> -> vector<16x32xf32>
      %c0_45 = arith.constant 0 : index
      %c0_46 = arith.constant 0 : index
      %69 = vector.load %arg8[%c0_45, %c0_46] : memref<16x3xf32, #tpu.memory_space<vmem>>, vector<16x3xf32>
      %c0_47 = arith.constant 0 : index
      %c0_48 = arith.constant 0 : index
      %70 = vector.load %arg24[%c0_47, %c0_48] : memref<3x16xf32, #tpu.memory_space<vmem>>, vector<3x16xf32>
      %71 = vector.extract_strided_slice %69 {offsets = [0, 0], sizes = [16, 1], strides = [1, 1]} : vector<16x3xf32> to vector<16x1xf32>
      %72 = vector.extract_strided_slice %70 {offsets = [0, 0], sizes = [1, 16], strides = [1, 1]} : vector<3x16xf32> to vector<1x16xf32>
      %73 = vector.broadcast %71 : vector<16x1xf32> to vector<16x16xf32>
      %74 = vector.broadcast %72 : vector<1x16xf32> to vector<16x16xf32>
      %75 = arith.mulf %73, %74 : vector<16x16xf32>
      %76 = vector.extract_strided_slice %69 {offsets = [0, 1], sizes = [16, 1], strides = [1, 1]} : vector<16x3xf32> to vector<16x1xf32>
      %77 = vector.extract_strided_slice %70 {offsets = [1, 0], sizes = [1, 16], strides = [1, 1]} : vector<3x16xf32> to vector<1x16xf32>
      %78 = vector.broadcast %76 : vector<16x1xf32> to vector<16x16xf32>
      %79 = vector.broadcast %77 : vector<1x16xf32> to vector<16x16xf32>
      %80 = arith.mulf %78, %79 : vector<16x16xf32>
      %81 = arith.addf %75, %80 : vector<16x16xf32>
      %82 = vector.extract_strided_slice %69 {offsets = [0, 2], sizes = [16, 1], strides = [1, 1]} : vector<16x3xf32> to vector<16x1xf32>
      %83 = vector.extract_strided_slice %70 {offsets = [2, 0], sizes = [1, 16], strides = [1, 1]} : vector<3x16xf32> to vector<1x16xf32>
      %84 = vector.broadcast %82 : vector<16x1xf32> to vector<16x16xf32>
      %85 = vector.broadcast %83 : vector<1x16xf32> to vector<16x16xf32>
      %86 = arith.mulf %84, %85 : vector<16x16xf32>
      %87 = arith.addf %81, %86 : vector<16x16xf32>
      %88 = arith.truncf %68 : vector<16x32xf32> to vector<16x32xbf16>
      %c0_49 = arith.constant 0 : index
      %c0_50 = arith.constant 0 : index
      %89 = vector.load %arg23[%c0_49, %c0_50] : memref<32x16xbf16, #tpu.memory_space<vmem>>, vector<32x16xbf16>
      %cst_51 = arith.constant dense<0.000000e+00> : vector<16x16xf32>
      %90 = tpu.matmul %88, %89, %cst_51 {dimension_numbers = #tpu.dot_dimension_numbers<[1], [0], [0], [1], [0, 0, 1, 1], [], []>} : vector<16x32xbf16>, vector<32x16xbf16>, vector<16x16xf32> -> vector<16x16xf32>
      %91 = arith.addf %90, %87 : vector<16x16xf32>
      %c0_52 = arith.constant 0 : index
      %c0_53 = arith.constant 0 : index
      %92 = vector.load %arg25[%c0_52, %c0_53] : memref<1x16xf32, #tpu.memory_space<vmem>>, vector<1x16xf32>
      %93 = vector.broadcast %92 : vector<1x16xf32> to vector<16x16xf32>
      %94 = arith.addf %91, %93 : vector<16x16xf32>
      %cst_54 = arith.constant 0.000000e+00 : f32
      %95 = vector.broadcast %cst_54 : f32 to vector<16x16xf32>
      %96 = arith.maximumf %94, %95 : vector<16x16xf32>
      %97 = math.absf %94 : vector<16x16xf32>
      %cst_55 = arith.constant 0.000000e+00 : f32
      %98 = vector.broadcast %cst_55 : f32 to vector<16x16xf32>
      %99 = arith.subf %98, %97 : vector<16x16xf32>
      %100 = math.exp %99 : vector<16x16xf32>
      %cst_56 = arith.constant 1.000000e+00 : f32
      %101 = vector.broadcast %cst_56 : f32 to vector<16x16xf32>
      %102 = arith.addf %101, %100 : vector<16x16xf32>
      %103 = math.log %102 : vector<16x16xf32>
      %104 = arith.addf %96, %103 : vector<16x16xf32>
      %cst_57 = arith.constant 0.693147182 : f32
      %105 = vector.broadcast %cst_57 : f32 to vector<16x16xf32>
      %106 = arith.subf %104, %105 : vector<16x16xf32>
      %c0_58 = arith.constant 0 : index
      %c0_59 = arith.constant 0 : index
      %107 = vector.load %arg9[%c0_58, %c0_59] : memref<8x16xf32, #tpu.memory_space<vmem>>, vector<8x16xf32>
      %cst_60 = arith.constant dense<0.000000e+00> : vector<8x16xf32>
      %108 = tpu.matmul %107, %106, %cst_60 {dimension_numbers = #tpu.dot_dimension_numbers<[1], [0], [0], [1], [0, 0, 1, 1], [], []>} : vector<8x16xf32>, vector<16x16xf32>, vector<8x16xf32> -> vector<8x16xf32>
      %c0_61 = arith.constant 0 : index
      %c0_62 = arith.constant 0 : index
      %109 = vector.load %arg10[%c0_61, %c0_62] : memref<8x2xf32, #tpu.memory_space<vmem>>, vector<8x2xf32>
      %c0_63 = arith.constant 0 : index
      %c0_64 = arith.constant 0 : index
      %110 = vector.load %arg27[%c0_63, %c0_64] : memref<2x128xf32, #tpu.memory_space<vmem>>, vector<2x128xf32>
      %111 = vector.extract_strided_slice %109 {offsets = [0, 0], sizes = [8, 1], strides = [1, 1]} : vector<8x2xf32> to vector<8x1xf32>
      %112 = vector.extract_strided_slice %110 {offsets = [0, 0], sizes = [1, 128], strides = [1, 1]} : vector<2x128xf32> to vector<1x128xf32>
      %113 = vector.broadcast %111 : vector<8x1xf32> to vector<8x128xf32>
      %114 = vector.broadcast %112 : vector<1x128xf32> to vector<8x128xf32>
      %115 = arith.mulf %113, %114 : vector<8x128xf32>
      %116 = vector.extract_strided_slice %109 {offsets = [0, 1], sizes = [8, 1], strides = [1, 1]} : vector<8x2xf32> to vector<8x1xf32>
      %117 = vector.extract_strided_slice %110 {offsets = [1, 0], sizes = [1, 128], strides = [1, 1]} : vector<2x128xf32> to vector<1x128xf32>
      %118 = vector.broadcast %116 : vector<8x1xf32> to vector<8x128xf32>
      %119 = vector.broadcast %117 : vector<1x128xf32> to vector<8x128xf32>
      %120 = arith.mulf %118, %119 : vector<8x128xf32>
      %121 = arith.addf %115, %120 : vector<8x128xf32>
      %122 = arith.truncf %108 : vector<8x16xf32> to vector<8x16xbf16>
      %c0_65 = arith.constant 0 : index
      %c0_66 = arith.constant 0 : index
      %123 = vector.load %arg26[%c0_65, %c0_66] : memref<16x128xbf16, #tpu.memory_space<vmem>>, vector<16x128xbf16>
      %cst_67 = arith.constant dense<0.000000e+00> : vector<8x128xf32>
      %124 = tpu.matmul %122, %123, %cst_67 {dimension_numbers = #tpu.dot_dimension_numbers<[1], [0], [0], [1], [0, 0, 1, 1], [], []>} : vector<8x16xbf16>, vector<16x128xbf16>, vector<8x128xf32> -> vector<8x128xf32>
      %125 = arith.addf %124, %121 : vector<8x128xf32>
      %c0_68 = arith.constant 0 : index
      %c0_69 = arith.constant 0 : index
      %126 = vector.load %arg28[%c0_68, %c0_69] : memref<1x128xf32, #tpu.memory_space<vmem>>, vector<1x128xf32>
      %127 = vector.broadcast %126 : vector<1x128xf32> to vector<8x128xf32>
      %128 = arith.addf %125, %127 : vector<8x128xf32>
      %c0_70 = arith.constant 0 : index
      %c0_71 = arith.constant 0 : index
      %129 = vector.load %arg29[%c0_70, %c0_71] : memref<8x128xf32, #tpu.memory_space<vmem>>, vector<8x128xf32>
      tpu.vector_store %arg29[%c0_70, %c0_71], %128 {strides = array<i32>} : memref<8x128xf32, #tpu.memory_space<vmem>>, vector<8x128xf32>,
    } else {
    }
    return
  }
  func.func @transform_0(%arg0: i32, %arg1: i32) -> (i32, i32) {
    %c0_i32 = arith.constant 0 : i32
    %c0_i32_0 = arith.constant 0 : i32
    return %arg1, %c0_i32 : i32, i32
  }
  func.func @transform_1(%arg0: i32, %arg1: i32) -> (i32, i32) {
    %c0_i32 = arith.constant 0 : i32
    %c0_i32_0 = arith.constant 0 : i32
    return %arg1, %c0_i32 : i32, i32
  }
  func.func @transform_2(%arg0: i32, %arg1: i32) -> (i32, i32) {
    %c0_i32 = arith.constant 0 : i32
    %c0_i32_0 = arith.constant 0 : i32
    return %c0_i32, %arg1 : i32, i32
  }
  func.func @transform_3(%arg0: i32, %arg1: i32) -> (i32, i32) {
    %c0_i32 = arith.constant 0 : i32
    %c0_i32_0 = arith.constant 0 : i32
    %c0_i32_1 = arith.constant 0 : i32
    return %c0_i32, %c0_i32_0 : i32, i32
  }
  func.func @transform_4(%arg0: i32, %arg1: i32) -> (i32, i32) {
    %c0_i32 = arith.constant 0 : i32
    %c0_i32_0 = arith.constant 0 : i32
    %c0_i32_1 = arith.constant 0 : i32
    return %c0_i32, %c0_i32_0 : i32, i32
  }
  func.func @transform_5(%arg0: i32, %arg1: i32) -> (i32, i32) {
    %c0_i32 = arith.constant 0 : i32
    %c0_i32_0 = arith.constant 0 : i32
    %c0_i32_1 = arith.constant 0 : i32
    return %c0_i32, %c0_i32_0 : i32, i32
  }
  func.func @transform_6(%arg0: i32, %arg1: i32) -> (i32, i32) {
    %c0_i32 = arith.constant 0 : i32
    %c0_i32_0 = arith.constant 0 : i32
    %c0_i32_1 = arith.constant 0 : i32
    return %c0_i32, %c0_i32_0 : i32, i32
  }
  func.func @transform_7(%arg0: i32, %arg1: i32) -> (i32, i32) {
    %c0_i32 = arith.constant 0 : i32
    %c0_i32_0 = arith.constant 0 : i32
    %c0_i32_1 = arith.constant 0 : i32
    return %c0_i32, %c0_i32_0 : i32, i32
  }
  func.func @transform_8(%arg0: i32, %arg1: i32) -> (i32, i32) {
    %c0_i32 = arith.constant 0 : i32
    %c0_i32_0 = arith.constant 0 : i32
    %c0_i32_1 = arith.constant 0 : i32
    return %c0_i32, %c0_i32_0 : i32, i32
  }
  func.func @transform_9(%arg0: i32, %arg1: i32) -> (i32, i32, i32) {
    %c0_i32 = arith.constant 0 : i32
    %c0_i32_0 = arith.constant 0 : i32
    %c0_i32_1 = arith.constant 0 : i32
    return %arg0, %c0_i32, %c0_i32_0 : i32, i32, i32
  }
  func.func @transform_10(%arg0: i32, %arg1: i32) -> (i32, i32, i32) {
    %c0_i32 = arith.constant 0 : i32
    %c0_i32_0 = arith.constant 0 : i32
    %c0_i32_1 = arith.constant 0 : i32
    return %arg0, %c0_i32, %c0_i32_0 : i32, i32, i32
  }
  func.func @transform_11(%arg0: i32, %arg1: i32) -> (i32, i32, i32) {
    %c0_i32 = arith.constant 0 : i32
    %c0_i32_0 = arith.constant 0 : i32
    %c0_i32_1 = arith.constant 0 : i32
    return %arg0, %c0_i32, %c0_i32_0 : i32, i32, i32
  }
  func.func @transform_12(%arg0: i32, %arg1: i32) -> (i32, i32, i32) {
    %c0_i32 = arith.constant 0 : i32
    %c0_i32_0 = arith.constant 0 : i32
    %c0_i32_1 = arith.constant 0 : i32
    return %arg0, %c0_i32, %c0_i32_0 : i32, i32, i32
  }
  func.func @transform_13(%arg0: i32, %arg1: i32) -> (i32, i32, i32) {
    %c0_i32 = arith.constant 0 : i32
    %c0_i32_0 = arith.constant 0 : i32
    %c0_i32_1 = arith.constant 0 : i32
    return %arg0, %c0_i32, %c0_i32_0 : i32, i32, i32
  }
  func.func @transform_14(%arg0: i32, %arg1: i32) -> (i32, i32, i32) {
    %c0_i32 = arith.constant 0 : i32
    %c0_i32_0 = arith.constant 0 : i32
    %c0_i32_1 = arith.constant 0 : i32
    return %arg0, %c0_i32, %c0_i32_0 : i32, i32, i32
  }
  func.func @transform_15(%arg0: i32, %arg1: i32) -> (i32, i32, i32) {
    %c0_i32 = arith.constant 0 : i32
    %c0_i32_0 = arith.constant 0 : i32
    %c0_i32_1 = arith.constant 0 : i32
    return %arg0, %c0_i32, %c0_i32_0 : i32, i32, i32
  }
  func.func @transform_16(%arg0: i32, %arg1: i32) -> (i32, i32, i32) {
    %c0_i32 = arith.constant 0 : i32
    %c0_i32_0 = arith.constant 0 : i32
    %c0_i32_1 = arith.constant 0 : i32
    return %arg0, %c0_i32, %c0_i32_0 : i32, i32, i32
  }
  func.func @transform_17(%arg0: i32, %arg1: i32) -> (i32, i32, i32) {
    %c0_i32 = arith.constant 0 : i32
    %c0_i32_0 = arith.constant 0 : i32
    %c0_i32_1 = arith.constant 0 : i32
    return %arg0, %c0_i32, %c0_i32_0 : i32, i32, i32
  }
  func.func @transform_18(%arg0: i32, %arg1: i32) -> (i32, i32, i32) {
    %c0_i32 = arith.constant 0 : i32
    %c0_i32_0 = arith.constant 0 : i32
    %c0_i32_1 = arith.constant 0 : i32
    return %arg0, %c0_i32, %c0_i32_0 : i32, i32, i32
  }
  func.func @transform_19(%arg0: i32, %arg1: i32) -> (i32, i32, i32) {
    %c0_i32 = arith.constant 0 : i32
    %c0_i32_0 = arith.constant 0 : i32
    %c0_i32_1 = arith.constant 0 : i32
    return %arg0, %c0_i32, %c0_i32_0 : i32, i32, i32
  }
  func.func @transform_20(%arg0: i32, %arg1: i32) -> (i32, i32, i32) {
    %c0_i32 = arith.constant 0 : i32
    %c0_i32_0 = arith.constant 0 : i32
    %c0_i32_1 = arith.constant 0 : i32
    return %arg0, %c0_i32, %c0_i32_0 : i32, i32, i32
  }
  func.func @transform_21(%arg0: i32, %arg1: i32) -> (i32, i32) {
    %c0_i32 = arith.constant 0 : i32
    %c0_i32_0 = arith.constant 0 : i32
    %c0_i32_1 = arith.constant 0 : i32
    return %c0_i32, %c0_i32_0 : i32, i32
  }
  func.func @transform_22(%arg0: i32, %arg1: i32) -> (i32, i32) {
    %c0_i32 = arith.constant 0 : i32
    %c0_i32_0 = arith.constant 0 : i32
    %c0_i32_1 = arith.constant 0 : i32
    return %c0_i32, %c0_i32_0 : i32, i32
  }
  func.func @transform_23(%arg0: i32, %arg1: i32) -> (i32, i32) {
    %c0_i32 = arith.constant 0 : i32
    %c0_i32_0 = arith.constant 0 : i32
    %c0_i32_1 = arith.constant 0 : i32
    return %c0_i32, %c0_i32_0 : i32, i32
  }
  func.func @transform_24(%arg0: i32, %arg1: i32) -> (i32, i32) {
    %c0_i32 = arith.constant 0 : i32
    %c0_i32_0 = arith.constant 0 : i32
    %c0_i32_1 = arith.constant 0 : i32
    return %c0_i32, %c0_i32_0 : i32, i32
  }
  func.func @transform_25(%arg0: i32, %arg1: i32) -> (i32, i32) {
    %c0_i32 = arith.constant 0 : i32
    %c0_i32_0 = arith.constant 0 : i32
    %c0_i32_1 = arith.constant 0 : i32
    return %c0_i32, %c0_i32_0 : i32, i32
  }
  func.func @transform_26(%arg0: i32, %arg1: i32) -> (i32, i32) {
    %c0_i32 = arith.constant 0 : i32
    %c0_i32_0 = arith.constant 0 : i32
    %c0_i32_1 = arith.constant 0 : i32
    return %c0_i32, %c0_i32_0 : i32, i32
  }
  func.func @transform_27(%arg0: i32, %arg1: i32) -> (i32, i32) {
    %c0_i32 = arith.constant 0 : i32
    %c0_i32_0 = arith.constant 0 : i32
    %c0_i32_1 = arith.constant 0 : i32
    return %c0_i32, %c0_i32_0 : i32, i32
  }
}

</mosaic_0001>

<llo_original>
// kernel: schnet_forward.1
$region0: #{schnet_forward.1}
  #allocation0 [shape = 'u32[]', space=smem, size = 0x4, offset = 0x4, fixed_abs, tag = 'smem constant byte address 0x4 - core index']
  #allocation1 [shape = 'u32[72,128]{1,0:T(1,128)}', space=vmem, size = 0x9000, scoped, tag = 'internal scratch']
  #allocation2 [shape = 'f32[16,32]{1,0:T(8,128)}', space=vmem, size = 0x2000, scoped, tag = 'scratch operand']
  #allocation3 [shape = 'f32[16,32]{1,0:T(8,128)}', space=vmem, size = 0x2000, scoped, tag = 'scratch operand']
  #allocation4 [shape = 'f32[16,32]{1,0:T(8,128)}', space=vmem, size = 0x2000, scoped, tag = 'scratch operand']
  %s0 = inlined_call_operand.vmem [shape: f32[256,1], index: 0, kind: input, shape index: {}]
  %s1 = inlined_call_operand.vmem [shape: bf16[256,16], index: 1, kind: input, shape index: {}]
  %s2 = inlined_call_operand.vmem [shape: bf16[16,256], index: 2, kind: input, shape index: {}]
  %s3 = inlined_call_operand.vmem [shape: f32[16,128], index: 3, kind: input, shape index: {}]
  %s4 = inlined_call_operand.vmem [shape: f32[128,32], index: 4, kind: input, shape index: {}]
  %s5 = inlined_call_operand.vmem [shape: f32[16,16], index: 5, kind: input, shape index: {}]
  %s6 = inlined_call_operand.vmem [shape: f32[16,3], index: 6, kind: input, shape index: {}]
  %s7 = inlined_call_operand.vmem [shape: f32[8,16], index: 7, kind: input, shape index: {}]
  %s8 = inlined_call_operand.vmem [shape: f32[8,2], index: 8, kind: input, shape index: {}]
  %s9 = inlined_call_operand.vmem [shape: bf16[2,32,32], index: 9, kind: input, shape index: {}]
  %s10 = inlined_call_operand.vmem [shape: f32[2,1,32], index: 10, kind: input, shape index: {}]
  %s11 = inlined_call_operand.vmem [shape: bf16[2,32,32], index: 11, kind: input, shape index: {}]
  %s12 = inlined_call_operand.vmem [shape: f32[2,1,32], index: 12, kind: input, shape index: {}]
  %s13 = inlined_call_operand.vmem [shape: bf16[2,64,32], index: 13, kind: input, shape index: {}]
  %s14 = inlined_call_operand.vmem [shape: f32[2,1,32], index: 14, kind: input, shape index: {}]
  %s15 = inlined_call_operand.vmem [shape: bf16[2,32,32], index: 15, kind: input, shape index: {}]
  %s16 = inlined_call_operand.vmem [shape: f32[2,1,32], index: 16, kind: input, shape index: {}]
  %s17 = inlined_call_operand.vmem [shape: bf16[2,32,32], index: 17, kind: input, shape index: {}]
  %s18 = inlined_call_operand.vmem [shape: f32[2,1,32], index: 18, kind: input, shape index: {}]
  %s19 = inlined_call_operand.vmem [shape: bf16[2,32,32], index: 19, kind: input, shape index: {}]
  %s20 = inlined_call_operand.vmem [shape: f32[2,1,32], index: 20, kind: input, shape index: {}]
  %s21 = inlined_call_operand.vmem [shape: bf16[32,16], index: 21, kind: input, shape index: {}]
  %s22 = inlined_call_operand.vmem [shape: f32[3,16], index: 22, kind: input, shape index: {}]
  %s23 = inlined_call_operand.vmem [shape: f32[1,16], index: 23, kind: input, shape index: {}]
  %s24 = inlined_call_operand.vmem [shape: bf16[16,128], index: 24, kind: input, shape index: {}]
  %s25 = inlined_call_operand.vmem [shape: f32[2,128], index: 25, kind: input, shape index: {}]
  %s26 = inlined_call_operand.vmem [shape: f32[1,128], index: 26, kind: input, shape index: {}]
  %s27 = inlined_call_operand.hbm [shape: f32[8,128], index: 27, kind: output, shape index: {}]
  %s28 = sld [smem:[#allocation0]]
  $region198: #{schnet_forward.1} parent=0
    _
  %s30 = ssub.s32 1, %s28
  %s31 = scalar_select 0, %s30, %s28
  $region1: #{schnet_forward.1} parent=0
    #allocation5 [shape = 'u8[8192]{0}', space=vmem, size = 0x2000, scoped, tag = 'input window, operand 2']
    #allocation6 [shape = 'u8[4096]{0}', space=vmem, size = 0x1000, scoped, tag = 'output window, operand 0, single buffered']
    #allocation7 [shape = 's32[2]{0}', space=sflag, size = 0x8, scoped, tag = 'scoped memory for schnet_forward.1']
    %32 = vsyncpa [#allocation7], 0
    loop: start=0, step=1, limit=6
    $region2: #{schnet_forward.1} parent=1 // loop_pre_header
      _
    $region3: #{schnet_forward.1} parent=1 // loop_header
      %s34 = sphi 0, %s38
      %p35 = scmp.ge.s32.totalorder %s34, 6
      %s41 = sphi 0, %s53
      %s42 = sphi 0, %s49
      %s43 = sphi 0, %s41
      %s44 = sphi 0, %s42
      %s45 = sphi 0, %s43
      %s46 = sphi 0, %s44
      %s56 = sphi 0, %s58
      %s59 = sphi 0, %s56
      %s60 = sphi 0, %s59
      %s76 = sphi 0, %s60
      %s82 = sphi 0, %s84
      %s85 = sphi 0, %s82
      %s86 = sphi 0, %s85
      %s102 = sphi 0, %s86
      %s108 = sphi 0, %s110
      %s111 = sphi 0, %s108
      %s112 = sphi 0, %s111
      %s128 = sphi 0, %s112
      %s132 = sphi 0, %s132
      %s134 = sphi 0, %s132
      %s135 = sphi 0, %s134
      %s149 = sphi 0, %s135
      %s153 = sphi 0, %s153
      %s155 = sphi 0, %s153
      %s156 = sphi 0, %s155
      %s170 = sphi 0, %s156
      %s174 = sphi 0, %s174
      %s176 = sphi 0, %s174
      %s177 = sphi 0, %s176
      %s191 = sphi 0, %s177
      %s195 = sphi 0, %s195
      %s197 = sphi 0, %s195
      %s198 = sphi 0, %s197
      %s212 = sphi 0, %s198
      %s216 = sphi 0, %s216
      %s218 = sphi 0, %s216
      %s219 = sphi 0, %s218
      %s233 = sphi 0, %s219
      %s237 = sphi 0, %s237
      %s239 = sphi 0, %s237
      %s240 = sphi 0, %s239
      %s254 = sphi 0, %s240
      %s260 = sphi 0, %s262
      %s263 = sphi 0, %s260
      %s264 = sphi 0, %s263
      %s280 = sphi 0, %s264
      %s286 = sphi 0, %s288
      %s289 = sphi 0, %s286
      %s290 = sphi 0, %s289
      %s306 = sphi 0, %s290
      %s312 = sphi 0, %s314
      %s315 = sphi 0, %s312
      %s316 = sphi 0, %s315
      %s332 = sphi 0, %s316
      %s338 = sphi 0, %s340
      %s341 = sphi 0, %s338
      %s342 = sphi 0, %s341
      %s358 = sphi 0, %s342
      %s364 = sphi 0, %s366
      %s367 = sphi 0, %s364
      %s368 = sphi 0, %s367
      %s384 = sphi 0, %s368
      %s390 = sphi 0, %s392
      %s393 = sphi 0, %s390
      %s394 = sphi 0, %s393
      %s410 = sphi 0, %s394
      %s416 = sphi 0, %s418
      %s419 = sphi 0, %s416
      %s420 = sphi 0, %s419
      %s436 = sphi 0, %s420
      %s442 = sphi 0, %s444
      %s445 = sphi 0, %s442
      %s446 = sphi 0, %s445
      %s462 = sphi 0, %s446
      %s468 = sphi 0, %s470
      %s471 = sphi 0, %s468
      %s472 = sphi 0, %s471
      %s488 = sphi 0, %s472
      %s494 = sphi 0, %s496
      %s497 = sphi 0, %s494
      %s498 = sphi 0, %s497
      %s514 = sphi 0, %s498
      %s520 = sphi 0, %s522
      %s523 = sphi 0, %s520
      %s524 = sphi 0, %s523
      %s540 = sphi 0, %s524
      %s546 = sphi 0, %s548
      %s549 = sphi 0, %s546
      %s550 = sphi 0, %s549
      %s566 = sphi 0, %s550
      %s570 = sphi 0, %s570
      %s572 = sphi 0, %s570
      %s573 = sphi 0, %s572
      %s587 = sphi 0, %s573
      %s591 = sphi 0, %s591
      %s593 = sphi 0, %s591
      %s594 = sphi 0, %s593
      %s608 = sphi 0, %s594
      %s612 = sphi 0, %s612
      %s614 = sphi 0, %s612
      %s615 = sphi 0, %s614
      %s629 = sphi 0, %s615
      %s633 = sphi 0, %s633
      %s635 = sphi 0, %s633
      %s636 = sphi 0, %s635
      %s650 = sphi 0, %s636
      %s654 = sphi 0, %s654
      %s656 = sphi 0, %s654
      %s657 = sphi 0, %s656
      %s671 = sphi 0, %s657
      %s675 = sphi 0, %s675
      %s677 = sphi 0, %s675
      %s678 = sphi 0, %s677
      %s692 = sphi 0, %s678
      %s696 = sphi 0, %s696
      %s698 = sphi 0, %s696
      %s699 = sphi 0, %s698
      %s713 = sphi 0, %s699
    $region4: #{schnet_forward.1} parent=1 // loop_header_branch
      %37 = sbr.rel (%p35) target = $region8
    $region5: #{schnet_forward.1} parent=1 // loop_body
      %s39 = ssub.s32 %s34, 1
      %s40 = ssub.s32 %s34, 2
      %s47 = sadd.s32 1, %s42
      %p48 = scmp.ge.s32.totalorder %s47, 2
      %s49 = scalar_select %p48, 0, %s47
      %s50 = sadd.s32 1, %s41
      %s51 = scalar_select %p48, %s50, %s41
      %p52 = scmp.ge.s32.totalorder %s51, 2
      %s53 = scalar_select %p52, 0, %s51
      %s54 = ssub.s32 %s42, %s49
      %p55 = scmp.eq.s32.totalorder %s54, 0
      %s57 = sadd.s32 %s56, 1
      %s58 = scalar_select %p55, %s56, %s57
      %p61 = pneg %p55
      %p62 = scmp.eq.s32.totalorder %s34, 3
      %p63 = por %p61, %p62
      %p64 = scmp.ne.s32.totalorder %s56, %s59
      %p65 = scmp.eq.s32.totalorder %s34, 0
      %p66 = por %p64, %p65
      %p67 = scmp.ne.s32.totalorder %s56, %s59
      %p68 = scmp.eq.s32.totalorder %s39, 3
      %p69 = por %p67, %p68
      %p70 = scmp.ne.s32.totalorder %s59, %s60
      %p71 = scmp.eq.s32.totalorder %s39, 0
      %p72 = por %p70, %p71
      %p73 = scmp.ne.s32.totalorder %s59, %s60
      %p74 = scmp.eq.s32.totalorder %s40, 3
      %p75 = por %p73, %p74
      %p77 = scmp.ne.s32.totalorder %s60, %s76
      %p78 = scmp.eq.s32.totalorder %s40, 0
      %p79 = por %p77, %p78
      %s80 = ssub.s32 %s42, %s49
      %p81 = scmp.eq.s32.totalorder %s80, 0
      %s83 = sadd.s32 %s82, 1
      %s84 = scalar_select %p81, %s82, %s83
      %p87 = pneg %p81
      %p88 = scmp.eq.s32.totalorder %s34, 3
      %p89 = por %p87, %p88
      %p90 = scmp.ne.s32.totalorder %s82, %s85
      %p91 = scmp.eq.s32.totalorder %s34, 0
      %p92 = por %p90, %p91
      %p93 = scmp.ne.s32.totalorder %s82, %s85
      %p94 = scmp.eq.s32.totalorder %s39, 3
      %p95 = por %p93, %p94
      %p96 = scmp.ne.s32.totalorder %s85, %s86
      %p97 = scmp.eq.s32.totalorder %s39, 0
      %p98 = por %p96, %p97
      %p99 = scmp.ne.s32.totalorder %s85, %s86
      %p100 = scmp.eq.s32.totalorder %s40, 3
      %p101 = por %p99, %p100
      %p103 = scmp.ne.s32.totalorder %s86, %s102
      %p104 = scmp.eq.s32.totalorder %s40, 0
      %p105 = por %p103, %p104
      %s106 = ssub.s32 %s42, %s49
      %p107 = scmp.eq.s32.totalorder %s106, 0
      %s109 = sadd.s32 %s108, 1
      %s110 = scalar_select %p107, %s108, %s109
      %p113 = pneg %p107
      %p114 = scmp.eq.s32.totalorder %s34, 3
      %p115 = por %p113, %p114
      %p116 = scmp.ne.s32.totalorder %s108, %s111
      %p117 = scmp.eq.s32.totalorder %s34, 0
      %p118 = por %p116, %p117
      %p119 = scmp.ne.s32.totalorder %s108, %s111
      %p120 = scmp.eq.s32.totalorder %s39, 3
      %p121 = por %p119, %p120
      %p122 = scmp.ne.s32.totalorder %s111, %s112
      %p123 = scmp.eq.s32.totalorder %s39, 0
      %p124 = por %p122, %p123
      %p125 = scmp.ne.s32.totalorder %s111, %s112
      %p126 = scmp.eq.s32.totalorder %s40, 3
      %p127 = por %p125, %p126
      %p129 = scmp.ne.s32.totalorder %s112, %s128
      %p130 = scmp.eq.s32.totalorder %s40, 0
      %p131 = por %p129, %p130
      %s133 = sadd.s32 %s132, 1
      %p136 = scmp.eq.s32.totalorder %s34, 3
      %p137 = scmp.ne.s32.totalorder %s132, %s134
      %p138 = scmp.eq.s32.totalorder %s34, 0
      %p139 = por %p137, %p138
      %p140 = scmp.ne.s32.totalorder %s132, %s134
      %p141 = scmp.eq.s32.totalorder %s39, 3
      %p142 = por %p140, %p141
      %p143 = scmp.ne.s32.totalorder %s134, %s135
      %p144 = scmp.eq.s32.totalorder %s39, 0
      %p145 = por %p143, %p144
      %p146 = scmp.ne.s32.totalorder %s134, %s135
      %p147 = scmp.eq.s32.totalorder %s40, 3
      %p148 = por %p146, %p147
      %p150 = scmp.ne.s32.totalorder %s135, %s149
      %p151 = scmp.eq.s32.totalorder %s40, 0
      %p152 = por %p150, %p151
      %s154 = sadd.s32 %s153, 1
      %p157 = scmp.eq.s32.totalorder %s34, 3
      %p158 = scmp.ne.s32.totalorder %s153, %s155
      %p159 = scmp.eq.s32.totalorder %s34, 0
      %p160 = por %p158, %p159
      %p161 = scmp.ne.s32.totalorder %s153, %s155
      %p162 = scmp.eq.s32.totalorder %s39, 3
      %p163 = por %p161, %p162
      %p164 = scmp.ne.s32.totalorder %s155, %s156
      %p165 = scmp.eq.s32.totalorder %s39, 0
      %p166 = por %p164, %p165
      %p167 = scmp.ne.s32.totalorder %s155, %s156
      %p168 = scmp.eq.s32.totalorder %s40, 3
      %p169 = por %p167, %p168
      %p171 = scmp.ne.s32.totalorder %s156, %s170
      %p172 = scmp.eq.s32.totalorder %s40, 0
      %p173 = por %p171, %p172
      %s175 = sadd.s32 %s174, 1
      %p178 = scmp.eq.s32.totalorder %s34, 3
      %p179 = scmp.ne.s32.totalorder %s174, %s176
      %p180 = scmp.eq.s32.totalorder %s34, 0
      %p181 = por %p179, %p180
      %p182 = scmp.ne.s32.totalorder %s174, %s176
      %p183 = scmp.eq.s32.totalorder %s39, 3
      %p184 = por %p182, %p183
      %p185 = scmp.ne.s32.totalorder %s176, %s177
      %p186 = scmp.eq.s32.totalorder %s39, 0
      %p187 = por %p185, %p186
      %p188 = scmp.ne.s32.totalorder %s176, %s177
      %p189 = scmp.eq.s32.totalorder %s40, 3
      %p190 = por %p188, %p189
      %p192 = scmp.ne.s32.totalorder %s177, %s191
      %p193 = scmp.eq.s32.totalorder %s40, 0
      %p194 = por %p192, %p193
      %s196 = sadd.s32 %s195, 1
      %p199 = scmp.eq.s32.totalorder %s34, 3
      %p200 = scmp.ne.s32.totalorder %s195, %s197
      %p201 = scmp.eq.s32.totalorder %s34, 0
      %p202 = por %p200, %p201
      %p203 = scmp.ne.s32.totalorder %s195, %s197
      %p204 = scmp.eq.s32.totalorder %s39, 3
      %p205 = por %p203, %p204
      %p206 = scmp.ne.s32.totalorder %s197, %s198
      %p207 = scmp.eq.s32.totalorder %s39, 0
      %p208 = por %p206, %p207
      %p209 = scmp.ne.s32.totalorder %s197, %s198
      %p210 = scmp.eq.s32.totalorder %s40, 3
      %p211 = por %p209, %p210
      %p213 = scmp.ne.s32.totalorder %s198, %s212
      %p214 = scmp.eq.s32.totalorder %s40, 0
      %p215 = por %p213, %p214
      %s217 = sadd.s32 %s216, 1
      %p220 = scmp.eq.s32.totalorder %s34, 3
      %p221 = scmp.ne.s32.totalorder %s216, %s218
      %p222 = scmp.eq.s32.totalorder %s34, 0
      %p223 = por %p221, %p222
      %p224 = scmp.ne.s32.totalorder %s216, %s218
      %p225 = scmp.eq.s32.totalorder %s39, 3
      %p226 = por %p224, %p225
      %p227 = scmp.ne.s32.totalorder %s218, %s219
      %p228 = scmp.eq.s32.totalorder %s39, 0
      %p229 = por %p227, %p228
      %p230 = scmp.ne.s32.totalorder %s218, %s219
      %p231 = scmp.eq.s32.totalorder %s40, 3
      %p232 = por %p230, %p231
      %p234 = scmp.ne.s32.totalorder %s219, %s233
      %p235 = scmp.eq.s32.totalorder %s40, 0
      %p236 = por %p234, %p235
      %s238 = sadd.s32 %s237, 1
      %p241 = scmp.eq.s32.totalorder %s34, 3
      %p242 = scmp.ne.s32.totalorder %s237, %s239
      %p243 = scmp.eq.s32.totalorder %s34, 0
      %p244 = por %p242, %p243
      %p245 = scmp.ne.s32.totalorder %s237, %s239
      %p246 = scmp.eq.s32.totalorder %s39, 3
      %p247 = por %p245, %p246
      %p248 = scmp.ne.s32.totalorder %s239, %s240
      %p249 = scmp.eq.s32.totalorder %s39, 0
      %p250 = por %p248, %p249
      %p251 = scmp.ne.s32.totalorder %s239, %s240
      %p252 = scmp.eq.s32.totalorder %s40, 3
      %p253 = por %p251, %p252
      %p255 = scmp.ne.s32.totalorder %s240, %s254
      %p256 = scmp.eq.s32.totalorder %s40, 0
      %p257 = por %p255, %p256
      %s258 = ssub.s32 %s41, %s53
      %p259 = scmp.eq.s32.totalorder %s258, 0
      %s261 = sadd.s32 %s260, 1
      %s262 = scalar_select %p259, %s260, %s261
      %p265 = pneg %p259
      %p266 = scmp.eq.s32.totalorder %s34, 3
      %p267 = por %p265, %p266
      %p268 = scmp.ne.s32.totalorder %s260, %s263
      %p269 = scmp.eq.s32.totalorder %s34, 0
      %p270 = por %p268, %p269
      %p271 = scmp.ne.s32.totalorder %s260, %s263
      %p272 = scmp.eq.s32.totalorder %s39, 3
      %p273 = por %p271, %p272
      %p274 = scmp.ne.s32.totalorder %s263, %s264
      %p275 = scmp.eq.s32.totalorder %s39, 0
      %p276 = por %p274, %p275
      %p277 = scmp.ne.s32.totalorder %s263, %s264
      %p278 = scmp.eq.s32.totalorder %s40, 3
      %p279 = por %p277, %p278
      %p281 = scmp.ne.s32.totalorder %s264, %s280
      %p282 = scmp.eq.s32.totalorder %s40, 0
      %p283 = por %p281, %p282
      %s284 = ssub.s32 %s41, %s53
      %p285 = scmp.eq.s32.totalorder %s284, 0
      %s287 = sadd.s32 %s286, 1
      %s288 = scalar_select %p285, %s286, %s287
      %p291 = pneg %p285
      %p292 = scmp.eq.s32.totalorder %s34, 3
      %p293 = por %p291, %p292
      %p294 = scmp.ne.s32.totalorder %s286, %s289
      %p295 = scmp.eq.s32.totalorder %s34, 0
      %p296 = por %p294, %p295
      %p297 = scmp.ne.s32.totalorder %s286, %s289
      %p298 = scmp.eq.s32.totalorder %s39, 3
      %p299 = por %p297, %p298
      %p300 = scmp.ne.s32.totalorder %s289, %s290
      %p301 = scmp.eq.s32.totalorder %s39, 0
      %p302 = por %p300, %p301
      %p303 = scmp.ne.s32.totalorder %s289, %s290
      %p304 = scmp.eq.s32.totalorder %s40, 3
      %p305 = por %p303, %p304
      %p307 = scmp.ne.s32.totalorder %s290, %s306
      %p308 = scmp.eq.s32.totalorder %s40, 0
      %p309 = por %p307, %p308
      %s310 = ssub.s32 %s41, %s53
      %p311 = scmp.eq.s32.totalorder %s310, 0
      %s313 = sadd.s32 %s312, 1
      %s314 = scalar_select %p311, %s312, %s313
      %p317 = pneg %p311
      %p318 = scmp.eq.s32.totalorder %s34, 3
      %p319 = por %p317, %p318
      %p320 = scmp.ne.s32.totalorder %s312, %s315
      %p321 = scmp.eq.s32.totalorder %s34, 0
      %p322 = por %p320, %p321
      %p323 = scmp.ne.s32.totalorder %s312, %s315
      %p324 = scmp.eq.s32.totalorder %s39, 3
      %p325 = por %p323, %p324
      %p326 = scmp.ne.s32.totalorder %s315, %s316
      %p327 = scmp.eq.s32.totalorder %s39, 0
      %p328 = por %p326, %p327
      %p329 = scmp.ne.s32.totalorder %s315, %s316
      %p330 = scmp.eq.s32.totalorder %s40, 3
      %p331 = por %p329, %p330
      %p333 = scmp.ne.s32.totalorder %s316, %s332
      %p334 = scmp.eq.s32.totalorder %s40, 0
      %p335 = por %p333, %p334
      %s336 = ssub.s32 %s41, %s53
      %p337 = scmp.eq.s32.totalorder %s336, 0
      %s339 = sadd.s32 %s338, 1
      %s340 = scalar_select %p337, %s338, %s339
      %p343 = pneg %p337
      %p344 = scmp.eq.s32.totalorder %s34, 3
      %p345 = por %p343, %p344
      %p346 = scmp.ne.s32.totalorder %s338, %s341
      %p347 = scmp.eq.s32.totalorder %s34, 0
      %p348 = por %p346, %p347
      %p349 = scmp.ne.s32.totalorder %s338, %s341
      %p350 = scmp.eq.s32.totalorder %s39, 3
      %p351 = por %p349, %p350
      %p352 = scmp.ne.s32.totalorder %s341, %s342
      %p353 = scmp.eq.s32.totalorder %s39, 0
      %p354 = por %p352, %p353
      %p355 = scmp.ne.s32.totalorder %s341, %s342
      %p356 = scmp.eq.s32.totalorder %s40, 3
      %p357 = por %p355, %p356
      %p359 = scmp.ne.s32.totalorder %s342, %s358
      %p360 = scmp.eq.s32.totalorder %s40, 0
      %p361 = por %p359, %p360
      %s362 = ssub.s32 %s41, %s53
      %p363 = scmp.eq.s32.totalorder %s362, 0
      %s365 = sadd.s32 %s364, 1
      %s366 = scalar_select %p363, %s364, %s365
      %p369 = pneg %p363
      %p370 = scmp.eq.s32.totalorder %s34, 3
      %p371 = por %p369, %p370
      %p372 = scmp.ne.s32.totalorder %s364, %s367
      %p373 = scmp.eq.s32.totalorder %s34, 0
      %p374 = por %p372, %p373
      %p375 = scmp.ne.s32.totalorder %s364, %s367
      %p376 = scmp.eq.s32.totalorder %s39, 3
      %p377 = por %p375, %p376
      %p378 = scmp.ne.s32.totalorder %s367, %s368
      %p379 = scmp.eq.s32.totalorder %s39, 0
      %p380 = por %p378, %p379
      %p381 = scmp.ne.s32.totalorder %s367, %s368
      %p382 = scmp.eq.s32.totalorder %s40, 3
      %p383 = por %p381, %p382
      %p385 = scmp.ne.s32.totalorder %s368, %s384
      %p386 = scmp.eq.s32.totalorder %s40, 0
      %p387 = por %p385, %p386
      %s388 = ssub.s32 %s41, %s53
      %p389 = scmp.eq.s32.totalorder %s388, 0
      %s391 = sadd.s32 %s390, 1
      %s392 = scalar_select %p389, %s390, %s391
      %p395 = pneg %p389
      %p396 = scmp.eq.s32.totalorder %s34, 3
      %p397 = por %p395, %p396
      %p398 = scmp.ne.s32.totalorder %s390, %s393
      %p399 = scmp.eq.s32.totalorder %s34, 0
      %p400 = por %p398, %p399
      %p401 = scmp.ne.s32.totalorder %s390, %s393
      %p402 = scmp.eq.s32.totalorder %s39, 3
      %p403 = por %p401, %p402
      %p404 = scmp.ne.s32.totalorder %s393, %s394
      %p405 = scmp.eq.s32.totalorder %s39, 0
      %p406 = por %p404, %p405
      %p407 = scmp.ne.s32.totalorder %s393, %s394
      %p408 = scmp.eq.s32.totalorder %s40, 3
      %p409 = por %p407, %p408
      %p411 = scmp.ne.s32.totalorder %s394, %s410
      %p412 = scmp.eq.s32.totalorder %s40, 0
      %p413 = por %p411, %p412
      %s414 = ssub.s32 %s41, %s53
      %p415 = scmp.eq.s32.totalorder %s414, 0
      %s417 = sadd.s32 %s416, 1
      %s418 = scalar_select %p415, %s416, %s417
      %p421 = pneg %p415
      %p422 = scmp.eq.s32.totalorder %s34, 3
      %p423 = por %p421, %p422
      %p424 = scmp.ne.s32.totalorder %s416, %s419
      %p425 = scmp.eq.s32.totalorder %s34, 0
      %p426 = por %p424, %p425
      %p427 = scmp.ne.s32.totalorder %s416, %s419
      %p428 = scmp.eq.s32.totalorder %s39, 3
      %p429 = por %p427, %p428
      %p430 = scmp.ne.s32.totalorder %s419, %s420
      %p431 = scmp.eq.s32.totalorder %s39, 0
      %p432 = por %p430, %p431
      %p433 = scmp.ne.s32.totalorder %s419, %s420
      %p434 = scmp.eq.s32.totalorder %s40, 3
      %p435 = por %p433, %p434
      %p437 = scmp.ne.s32.totalorder %s420, %s436
      %p438 = scmp.eq.s32.totalorder %s40, 0
      %p439 = por %p437, %p438
      %s440 = ssub.s32 %s41, %s53
      %p441 = scmp.eq.s32.totalorder %s440, 0
      %s443 = sadd.s32 %s442, 1
      %s444 = scalar_select %p441, %s442, %s443
      %p447 = pneg %p441
      %p448 = scmp.eq.s32.totalorder %s34, 3
      %p449 = por %p447, %p448
      %p450 = scmp.ne.s32.totalorder %s442, %s445
      %p451 = scmp.eq.s32.totalorder %s34, 0
      %p452 = por %p450, %p451
      %p453 = scmp.ne.s32.totalorder %s442, %s445
      %p454 = scmp.eq.s32.totalorder %s39, 3
      %p455 = por %p453, %p454
      %p456 = scmp.ne.s32.totalorder %s445, %s446
      %p457 = scmp.eq.s32.totalorder %s39, 0
      %p458 = por %p456, %p457
      %p459 = scmp.ne.s32.totalorder %s445, %s446
      %p460 = scmp.eq.s32.totalorder %s40, 3
      %p461 = por %p459, %p460
      %p463 = scmp.ne.s32.totalorder %s446, %s462
      %p464 = scmp.eq.s32.totalorder %s40, 0
      %p465 = por %p463, %p464
      %s466 = ssub.s32 %s41, %s53
      %p467 = scmp.eq.s32.totalorder %s466, 0
      %s469 = sadd.s32 %s468, 1
      %s470 = scalar_select %p467, %s468, %s469
      %p473 = pneg %p467
      %p474 = scmp.eq.s32.totalorder %s34, 3
      %p475 = por %p473, %p474
      %p476 = scmp.ne.s32.totalorder %s468, %s471
      %p477 = scmp.eq.s32.totalorder %s34, 0
      %p478 = por %p476, %p477
      %p479 = scmp.ne.s32.totalorder %s468, %s471
      %p480 = scmp.eq.s32.totalorder %s39, 3
      %p481 = por %p479, %p480
      %p482 = scmp.ne.s32.totalorder %s471, %s472
      %p483 = scmp.eq.s32.totalorder %s39, 0
      %p484 = por %p482, %p483
      %p485 = scmp.ne.s32.totalorder %s471, %s472
      %p486 = scmp.eq.s32.totalorder %s40, 3
      %p487 = por %p485, %p486
      %p489 = scmp.ne.s32.totalorder %s472, %s488
      %p490 = scmp.eq.s32.totalorder %s40, 0
      %p491 = por %p489, %p490
      %s492 = ssub.s32 %s41, %s53
      %p493 = scmp.eq.s32.totalorder %s492, 0
      %s495 = sadd.s32 %s494, 1
      %s496 = scalar_select %p493, %s494, %s495
      %p499 = pneg %p493
      %p500 = scmp.eq.s32.totalorder %s34, 3
      %p501 = por %p499, %p500
      %p502 = scmp.ne.s32.totalorder %s494, %s497
      %p503 = scmp.eq.s32.totalorder %s34, 0
      %p504 = por %p502, %p503
      %p505 = scmp.ne.s32.totalorder %s494, %s497
      %p506 = scmp.eq.s32.totalorder %s39, 3
      %p507 = por %p505, %p506
      %p508 = scmp.ne.s32.totalorder %s497, %s498
      %p509 = scmp.eq.s32.totalorder %s39, 0
      %p510 = por %p508, %p509
      %p511 = scmp.ne.s32.totalorder %s497, %s498
      %p512 = scmp.eq.s32.totalorder %s40, 3
      %p513 = por %p511, %p512
      %p515 = scmp.ne.s32.totalorder %s498, %s514
      %p516 = scmp.eq.s32.totalorder %s40, 0
      %p517 = por %p515, %p516
      %s518 = ssub.s32 %s41, %s53
      %p519 = scmp.eq.s32.totalorder %s518, 0
      %s521 = sadd.s32 %s520, 1
      %s522 = scalar_select %p519, %s520, %s521
      %p525 = pneg %p519
      %p526 = scmp.eq.s32.totalorder %s34, 3
      %p527 = por %p525, %p526
      %p528 = scmp.ne.s32.totalorder %s520, %s523
      %p529 = scmp.eq.s32.totalorder %s34, 0
      %p530 = por %p528, %p529
      %p531 = scmp.ne.s32.totalorder %s520, %s523
      %p532 = scmp.eq.s32.totalorder %s39, 3
      %p533 = por %p531, %p532
      %p534 = scmp.ne.s32.totalorder %s523, %s524
      %p535 = scmp.eq.s32.totalorder %s39, 0
      %p536 = por %p534, %p535
      %p537 = scmp.ne.s32.totalorder %s523, %s524
      %p538 = scmp.eq.s32.totalorder %s40, 3
      %p539 = por %p537, %p538
      %p541 = scmp.ne.s32.totalorder %s524, %s540
      %p542 = scmp.eq.s32.totalorder %s40, 0
      %p543 = por %p541, %p542
      %s544 = ssub.s32 %s41, %s53
      %p545 = scmp.eq.s32.totalorder %s544, 0
      %s547 = sadd.s32 %s546, 1
      %s548 = scalar_select %p545, %s546, %s547
      %p551 = pneg %p545
      %p552 = scmp.eq.s32.totalorder %s34, 3
      %p553 = por %p551, %p552
      %p554 = scmp.ne.s32.totalorder %s546, %s549
      %p555 = scmp.eq.s32.totalorder %s34, 0
      %p556 = por %p554, %p555
      %p557 = scmp.ne.s32.totalorder %s546, %s549
      %p558 = scmp.eq.s32.totalorder %s39, 3
      %p559 = por %p557, %p558
      %p560 = scmp.ne.s32.totalorder %s549, %s550
      %p561 = scmp.eq.s32.totalorder %s39, 0
      %p562 = por %p560, %p561
      %p563 = scmp.ne.s32.totalorder %s549, %s550
      %p564 = scmp.eq.s32.totalorder %s40, 3
      %p565 = por %p563, %p564
      %p567 = scmp.ne.s32.totalorder %s550, %s566
      %p568 = scmp.eq.s32.totalorder %s40, 0
      %p569 = por %p567, %p568
      %s571 = sadd.s32 %s570, 1
      %p574 = scmp.eq.s32.totalorder %s34, 3
      %p575 = scmp.ne.s32.totalorder %s570, %s572
      %p576 = scmp.eq.s32.totalorder %s34, 0
      %p577 = por %p575, %p576
      %p578 = scmp.ne.s32.totalorder %s570, %s572
      %p579 = scmp.eq.s32.totalorder %s39, 3
      %p580 = por %p578, %p579
      %p581 = scmp.ne.s32.totalorder %s572, %s573
      %p582 = scmp.eq.s32.totalorder %s39, 0
      %p583 = por %p581, %p582
      %p584 = scmp.ne.s32.totalorder %s572, %s573
      %p585 = scmp.eq.s32.totalorder %s40, 3
      %p586 = por %p584, %p585
      %p588 = scmp.ne.s32.totalorder %s573, %s587
      %p589 = scmp.eq.s32.totalorder %s40, 0
      %p590 = por %p588, %p589
      %s592 = sadd.s32 %s591, 1
      %p595 = scmp.eq.s32.totalorder %s34, 3
      %p596 = scmp.ne.s32.totalorder %s591, %s593
      %p597 = scmp.eq.s32.totalorder %s34, 0
      %p598 = por %p596, %p597
      %p599 = scmp.ne.s32.totalorder %s591, %s593
      %p600 = scmp.eq.s32.totalorder %s39, 3
      %p601 = por %p599, %p600
      %p602 = scmp.ne.s32.totalorder %s593, %s594
      %p603 = scmp.eq.s32.totalorder %s39, 0
      %p604 = por %p602, %p603
      %p605 = scmp.ne.s32.totalorder %s593, %s594
      %p606 = scmp.eq.s32.totalorder %s40, 3
      %p607 = por %p605, %p606
      %p609 = scmp.ne.s32.totalorder %s594, %s608
      %p610 = scmp.eq.s32.totalorder %s40, 0
      %p611 = por %p609, %p610
      %s613 = sadd.s32 %s612, 1
      %p616 = scmp.eq.s32.totalorder %s34, 3
      %p617 = scmp.ne.s32.totalorder %s612, %s614
      %p618 = scmp.eq.s32.totalorder %s34, 0
      %p619 = por %p617, %p618
      %p620 = scmp.ne.s32.totalorder %s612, %s614
      %p621 = scmp.eq.s32.totalorder %s39, 3
      %p622 = por %p620, %p621
      %p623 = scmp.ne.s32.totalorder %s614, %s615
      %p624 = scmp.eq.s32.totalorder %s39, 0
      %p625 = por %p623, %p624
      %p626 = scmp.ne.s32.totalorder %s614, %s615
      %p627 = scmp.eq.s32.totalorder %s40, 3
      %p628 = por %p626, %p627
      %p630 = scmp.ne.s32.totalorder %s615, %s629
      %p631 = scmp.eq.s32.totalorder %s40, 0
      %p632 = por %p630, %p631
      %s634 = sadd.s32 %s633, 1
      %p637 = scmp.eq.s32.totalorder %s34, 3
      %p638 = scmp.ne.s32.totalorder %s633, %s635
      %p639 = scmp.eq.s32.totalorder %s34, 0
      %p640 = por %p638, %p639
      %p641 = scmp.ne.s32.totalorder %s633, %s635
      %p642 = scmp.eq.s32.totalorder %s39, 3
      %p643 = por %p641, %p642
      %p644 = scmp.ne.s32.totalorder %s635, %s636
      %p645 = scmp.eq.s32.totalorder %s39, 0
      %p646 = por %p644, %p645
      %p647 = scmp.ne.s32.totalorder %s635, %s636
      %p648 = scmp.eq.s32.totalorder %s40, 3
      %p649 = por %p647, %p648
      %p651 = scmp.ne.s32.totalorder %s636, %s650
      %p652 = scmp.eq.s32.totalorder %s40, 0
      %p653 = por %p651, %p652
      %s655 = sadd.s32 %s654, 1
      %p658 = scmp.eq.s32.totalorder %s34, 3
      %p659 = scmp.ne.s32.totalorder %s654, %s656
      %p660 = scmp.eq.s32.totalorder %s34, 0
      %p661 = por %p659, %p660
      %p662 = scmp.ne.s32.totalorder %s654, %s656
      %p663 = scmp.eq.s32.totalorder %s39, 3
      %p664 = por %p662, %p663
      %p665 = scmp.ne.s32.totalorder %s656, %s657
      %p666 = scmp.eq.s32.totalorder %s39, 0
      %p667 = por %p665, %p666
      %p668 = scmp.ne.s32.totalorder %s656, %s657
      %p669 = scmp.eq.s32.totalorder %s40, 3
      %p670 = por %p668, %p669
      %p672 = scmp.ne.s32.totalorder %s657, %s671
      %p673 = scmp.eq.s32.totalorder %s40, 0
      %p674 = por %p672, %p673
      %s676 = sadd.s32 %s675, 1
      %p679 = scmp.eq.s32.totalorder %s34, 3
      %p680 = scmp.ne.s32.totalorder %s675, %s677
      %p681 = scmp.eq.s32.totalorder %s34, 0
      %p682 = por %p680, %p681
      %p683 = scmp.ne.s32.totalorder %s675, %s677
      %p684 = scmp.eq.s32.totalorder %s39, 3
      %p685 = por %p683, %p684
      %p686 = scmp.ne.s32.totalorder %s677, %s678
      %p687 = scmp.eq.s32.totalorder %s39, 0
      %p688 = por %p686, %p687
      %p689 = scmp.ne.s32.totalorder %s677, %s678
      %p690 = scmp.eq.s32.totalorder %s40, 3
      %p691 = por %p689, %p690
      %p693 = scmp.ne.s32.totalorder %s678, %s692
      %p694 = scmp.eq.s32.totalorder %s40, 0
      %p695 = por %p693, %p694
      %s697 = sadd.s32 %s696, 1
      %p700 = scmp.eq.s32.totalorder %s34, 3
      %p701 = scmp.ne.s32.totalorder %s696, %s698
      %p702 = scmp.eq.s32.totalorder %s34, 0
      %p703 = por %p701, %p702
      %p704 = scmp.ne.s32.totalorder %s696, %s698
      %p705 = scmp.eq.s32.totalorder %s39, 3
      %p706 = por %p704, %p705
      %p707 = scmp.ne.s32.totalorder %s698, %s699
      %p708 = scmp.eq.s32.totalorder %s39, 0
      %p709 = por %p707, %p708
      %p710 = scmp.ne.s32.totalorder %s698, %s699
      %p711 = scmp.eq.s32.totalorder %s40, 3
      %p712 = por %p710, %p711
      %p714 = scmp.ne.s32.totalorder %s699, %s713
      %p715 = scmp.eq.s32.totalorder %s40, 0
      %p716 = por %p714, %p715
      %p717 = scmp.le.s32.totalorder 1, %s34
      %p718 = scmp.lt.s32.totalorder %s34, 5
      %p719 = pnand %p717, %p718
      %p720 = pneg %p719
      // Predicated region
      $region9: #{schnet_forward.1} parent=5 // pred_check
        _
      $region10: #{schnet_forward.1} parent=5 // pred_check_branch
        %722 = sbr.rel (%p719) target = $region12
      $region11: #{schnet_forward.1} parent=5 // pred_region
        %s723 = ssub.s32 %s34, 1
        // Predicated region
        $region13: #{schnet_forward.1} parent=11 // pred_check
          %p724 = pneg %p145
        $region14: #{schnet_forward.1} parent=11 // pred_check_branch
          %726 = sbr.rel (%p724) target = $region16
        $region15: #{schnet_forward.1} parent=11 // pred_region
          _
        $region16: #{schnet_forward.1} parent=11 // pred_fallthru
          _
        // Predicated region
        $region17: #{schnet_forward.1} parent=11 // pred_check
          %p727 = pneg %p166
        $region18: #{schnet_forward.1} parent=11 // pred_check_branch
          %729 = sbr.rel (%p727) target = $region20
        $region19: #{schnet_forward.1} parent=11 // pred_region
          _
        $region20: #{schnet_forward.1} parent=11 // pred_fallthru
          _
        // Predicated region
        $region21: #{schnet_forward.1} parent=11 // pred_check
          %p730 = pneg %p187
        $region22: #{schnet_forward.1} parent=11 // pred_check_branch
          %732 = sbr.rel (%p730) target = $region24
        $region23: #{schnet_forward.1} parent=11 // pred_region
          _
        $region24: #{schnet_forward.1} parent=11 // pred_fallthru
          _
        // Predicated region
        $region25: #{schnet_forward.1} parent=11 // pred_check
          %p733 = pneg %p208
        $region26: #{schnet_forward.1} parent=11 // pred_check_branch
          %735 = sbr.rel (%p733) target = $region28
        $region27: #{schnet_forward.1} parent=11 // pred_region
          _
        $region28: #{schnet_forward.1} parent=11 // pred_fallthru
          _
        // Predicated region
        $region29: #{schnet_forward.1} parent=11 // pred_check
          %p736 = pneg %p229
        $region30: #{schnet_forward.1} parent=11 // pred_check_branch
          %738 = sbr.rel (%p736) target = $region32
        $region31: #{schnet_forward.1} parent=11 // pred_region
          _
        $region32: #{schnet_forward.1} parent=11 // pred_fallthru
          _
        // Predicated region
        $region33: #{schnet_forward.1} parent=11 // pred_check
          %p739 = pneg %p250
        $region34: #{schnet_forward.1} parent=11 // pred_check_branch
          %741 = sbr.rel (%p739) target = $region36
        $region35: #{schnet_forward.1} parent=11 // pred_region
          _
        $region36: #{schnet_forward.1} parent=11 // pred_fallthru
          _
        // Predicated region
        $region37: #{schnet_forward.1} parent=11 // pred_check
          %p742 = pneg %p583
        $region38: #{schnet_forward.1} parent=11 // pred_check_branch
          %744 = sbr.rel (%p742) target = $region40
        $region39: #{schnet_forward.1} parent=11 // pred_region
          _
        $region40: #{schnet_forward.1} parent=11 // pred_fallthru
          _
        // Predicated region
        $region41: #{schnet_forward.1} parent=11 // pred_check
          %p745 = pneg %p604
        $region42: #{schnet_forward.1} parent=11 // pred_check_branch
          %747 = sbr.rel (%p745) target = $region44
        $region43: #{schnet_forward.1} parent=11 // pred_region
          _
        $region44: #{schnet_forward.1} parent=11 // pred_fallthru
          _
        // Predicated region
        $region45: #{schnet_forward.1} parent=11 // pred_check
          %p748 = pneg %p625
        $region46: #{schnet_forward.1} parent=11 // pred_check_branch
          %750 = sbr.rel (%p748) target = $region48
        $region47: #{schnet_forward.1} parent=11 // pred_region
          _
        $region48: #{schnet_forward.1} parent=11 // pred_fallthru
          _
        // Predicated region
        $region49: #{schnet_forward.1} parent=11 // pred_check
          %p751 = pneg %p646
        $region50: #{schnet_forward.1} parent=11 // pred_check_branch
          %753 = sbr.rel (%p751) target = $region52
        $region51: #{schnet_forward.1} parent=11 // pred_region
          _
        $region52: #{schnet_forward.1} parent=11 // pred_fallthru
          _
        // Predicated region
        $region53: #{schnet_forward.1} parent=11 // pred_check
          %p754 = pneg %p667
        $region54: #{schnet_forward.1} parent=11 // pred_check_branch
          %756 = sbr.rel (%p754) target = $region56
        $region55: #{schnet_forward.1} parent=11 // pred_region
          _
        $region56: #{schnet_forward.1} parent=11 // pred_fallthru
          _
        // Predicated region
        $region57: #{schnet_forward.1} parent=11 // pred_check
          %p757 = pneg %p688
        $region58: #{schnet_forward.1} parent=11 // pred_check_branch
          %759 = sbr.rel (%p757) target = $region60
        $region59: #{schnet_forward.1} parent=11 // pred_region
          _
        $region60: #{schnet_forward.1} parent=11 // pred_fallthru
          _
      $region12: #{schnet_forward.1} parent=5 // pred_fallthru
        _
      %p760 = scmp.lt.s32.totalorder %s34, 4
      // Predicated region
      $region61: #{schnet_forward.1} parent=5 // pred_check
        %p761 = pneg %p760
      $region62: #{schnet_forward.1} parent=5 // pred_check_branch
        %763 = sbr.rel (%p761) target = $region64
      $region63: #{schnet_forward.1} parent=5 // pred_region
        // Predicated region
        $region65: #{schnet_forward.1} parent=63 // pred_check
          %p764 = pneg %p66
        $region66: #{schnet_forward.1} parent=63 // pred_check_branch
          %766 = sbr.rel (%p764) target = $region68
        $region67: #{schnet_forward.1} parent=63 // pred_region
          %s767 = smul.u32 16, %s42
          %p768 = scmp.lt.s32.totalorder %s767, 31
          %s769 = scalar_select %p768, %s767, 31
          %s770 = smul.addr %s769, 8
          %s771 = scalar_lea.vmem %s0, %s770
          %s772 = smul.u32 16, %s42
        $region68: #{schnet_forward.1} parent=63 // pred_fallthru
          _
        // Predicated region
        $region69: #{schnet_forward.1} parent=63 // pred_check
          %p773 = pneg %p92
        $region70: #{schnet_forward.1} parent=63 // pred_check_branch
          %775 = sbr.rel (%p773) target = $region72
        $region71: #{schnet_forward.1} parent=63 // pred_region
          %s776 = smul.u32 16, %s42
          %p777 = scmp.lt.s32.totalorder %s776, 31
          %s778 = scalar_select %p777, %s776, 31
          %s779 = smul.addr %s778, 4
          %s780 = scalar_lea.vmem %s1, %s779
          %s781 = smul.u32 16, %s42
        $region72: #{schnet_forward.1} parent=63 // pred_fallthru
          _
        // Predicated region
        $region73: #{schnet_forward.1} parent=63 // pred_check
          %p782 = pneg %p118
        $region74: #{schnet_forward.1} parent=63 // pred_check_branch
          %784 = sbr.rel (%p782) target = $region76
        $region75: #{schnet_forward.1} parent=63 // pred_region
          %s785 = sand.u32 %s108, 1
          %s786 = sand.u32 %s108, 1
          %s787 = smul.addr %s786, 8
          %s788 = scalar_lea.vmem [#allocation5], %s787
          %s789 = smul.addr %s42, 4
          %s790 = scalar_lea.vmem %s2, %s789
          // Predicated region
          $region77: #{schnet_forward.1} parent=75 // pred_check
            _
          $region78: #{schnet_forward.1} parent=75 // pred_check_branch
            %792 = sbr.rel (0) target = $region80
          $region79: #{schnet_forward.1} parent=75 // pred_region
            // Predicated region
            $region81: #{schnet_forward.1} parent=79 // pred_check
              _
            $region82: #{schnet_forward.1} parent=79 // pred_check_branch
              %794 = sbr.rel target = $region84
            $region83: #{schnet_forward.1} parent=79 // pred_region
              // Predicated region
              $region96: #{schnet_forward.1} parent=83 // pred_check
                _
              $region97: #{schnet_forward.1} parent=83 // pred_check_branch
                %812 = sbr.rel (0) target = $region99
              $region98: #{schnet_forward.1} parent=83 // pred_region
                loop: start=0, step=1, limit=1
                $region100: #{schnet_forward.1} parent=98 // loop_pre_header
                  _
                $region101: #{schnet_forward.1} parent=98 // loop_header
                  %s814 = sphi 0, %s818
                  %p815 = scmp.ge.s32.totalorder %s814, 1
                  %s819 = sphi %s790, %s790
                  %s820 = sphi %s788, %s788
                $region102: #{schnet_forward.1} parent=98 // loop_header_branch
                  %817 = sbr.rel (%p815) target = $region106
                $region103: #{schnet_forward.1} parent=98 // loop_body
                  _
                $region104: #{schnet_forward.1} parent=98 // loop_footer
                  %s818 = sadd.s32 1, %s814
                $region105: #{schnet_forward.1} parent=98 // loop_footer_branch
                  %813 = sbr.rel target = $region101
                $region106: #{schnet_forward.1} parent=98 // loop_exit
                  _
                %s822 = ssub.s32 16, 1
                loop: start=0, step=1, limit=1
                $region107: #{schnet_forward.1} parent=98 // loop_pre_header
                  _
                $region108: #{schnet_forward.1} parent=98 // loop_header
                  %s824 = sphi 0, %s828
                  %p825 = scmp.ge.s32.totalorder %s824, 1
                  %s829 = sphi %s790, %s790
                  %s830 = sphi %s788, %s788
                $region109: #{schnet_forward.1} parent=98 // loop_header_branch
                  %827 = sbr.rel (%p825) target = $region113
                $region110: #{schnet_forward.1} parent=98 // loop_body
                  %v831 = vld [vmem:[%s829] sm:%s822]
                  %832 = vst [vmem:[%s830] sm:%s822] %v831
                  %v833 = vld [vmem:[%s829 + $0x8] sm:%s822]
                  %834 = vst [vmem:[%s830 + $0x4] sm:%s822] %v833
                $region111: #{schnet_forward.1} parent=98 // loop_footer
                  %s828 = sadd.s32 1, %s824
                $region112: #{schnet_forward.1} parent=98 // loop_footer_branch
                  %823 = sbr.rel target = $region108
                $region113: #{schnet_forward.1} parent=98 // loop_exit
                  _
              $region99: #{schnet_forward.1} parent=83 // pred_fallthru
                _
            $region84: #{schnet_forward.1} parent=79 // pred_fallthru
              _
            // Predicated region
            $region85: #{schnet_forward.1} parent=79 // pred_check
              _
            $region86: #{schnet_forward.1} parent=79 // pred_check_branch
              %796 = sbr.rel (0) target = $region88
            $region87: #{schnet_forward.1} parent=79 // pred_region
              %s798 = ssub.s32 16, 1
              loop: start=0, step=1, limit=1
              $region89: #{schnet_forward.1} parent=87 // loop_pre_header
                _
              $region90: #{schnet_forward.1} parent=87 // loop_header
                %s800 = sphi 0, %s804
                %p801 = scmp.ge.s32.totalorder %s800, 1
                %s805 = sphi %s790, %s790
                %s806 = sphi %s788, %s788
              $region91: #{schnet_forward.1} parent=87 // loop_header_branch
                %803 = sbr.rel (%p801) target = $region95
              $region92: #{schnet_forward.1} parent=87 // loop_body
                %v807 = vld [vmem:[%s805] sm:%s798]
                %808 = vst [vmem:[%s806] sm:%s798] %v807
                %v809 = vld [vmem:[%s805 + $0x8] sm:%s798]
                %810 = vst [vmem:[%s806 + $0x4] sm:%s798] %v809
              $region93: #{schnet_forward.1} parent=87 // loop_footer
                %s804 = sadd.s32 1, %s800
              $region94: #{schnet_forward.1} parent=87 // loop_footer_branch
                %799 = sbr.rel target = $region90
              $region95: #{schnet_forward.1} parent=87 // loop_exit
                _
            $region88: #{schnet_forward.1} parent=79 // pred_fallthru
              _
          $region80: #{schnet_forward.1} parent=75 // pred_fallthru
            _
          %835 = vnop
        $region76: #{schnet_forward.1} parent=63 // pred_fallthru
          _
        // Predicated region
        $region114: #{schnet_forward.1} parent=63 // pred_check
          %p836 = pneg %p270
        $region115: #{schnet_forward.1} parent=63 // pred_check_branch
          %838 = sbr.rel (%p836) target = $region117
        $region116: #{schnet_forward.1} parent=63 // pred_region
          %p839 = scmp.lt.s32.totalorder %s41, 1
          %s840 = scalar_select %p839, %s41, 1
          %s841 = smul.addr %s840, 4
          %s842 = smul.addr %s841, 4
          %s843 = scalar_lea.vmem %s9, %s842
        $region117: #{schnet_forward.1} parent=63 // pred_fallthru
          _
        // Predicated region
        $region118: #{schnet_forward.1} parent=63 // pred_check
          %p844 = pneg %p296
        $region119: #{schnet_forward.1} parent=63 // pred_check_branch
          %846 = sbr.rel (%p844) target = $region121
        $region120: #{schnet_forward.1} parent=63 // pred_region
          %p847 = scmp.lt.s32.totalorder %s41, 1
          %s848 = scalar_select %p847, %s41, 1
          %s849 = scalar_lea.vmem %s10, %s848
        $region121: #{schnet_forward.1} parent=63 // pred_fallthru
          _
        // Predicated region
        $region122: #{schnet_forward.1} parent=63 // pred_check
          %p850 = pneg %p322
        $region123: #{schnet_forward.1} parent=63 // pred_check_branch
          %852 = sbr.rel (%p850) target = $region125
        $region124: #{schnet_forward.1} parent=63 // pred_region
          %p853 = scmp.lt.s32.totalorder %s41, 1
          %s854 = scalar_select %p853, %s41, 1
          %s855 = smul.addr %s854, 4
          %s856 = smul.addr %s855, 4
          %s857 = scalar_lea.vmem %s11, %s856
        $region125: #{schnet_forward.1} parent=63 // pred_fallthru
          _
        // Predicated region
        $region126: #{schnet_forward.1} parent=63 // pred_check
          %p858 = pneg %p348
        $region127: #{schnet_forward.1} parent=63 // pred_check_branch
          %860 = sbr.rel (%p858) target = $region129
        $region128: #{schnet_forward.1} parent=63 // pred_region
          %p861 = scmp.lt.s32.totalorder %s41, 1
          %s862 = scalar_select %p861, %s41, 1
          %s863 = scalar_lea.vmem %s12, %s862
        $region129: #{schnet_forward.1} parent=63 // pred_fallthru
          _
        // Predicated region
        $region130: #{schnet_forward.1} parent=63 // pred_check
          %p864 = pneg %p374
        $region131: #{schnet_forward.1} parent=63 // pred_check_branch
          %866 = sbr.rel (%p864) target = $region133
        $region132: #{schnet_forward.1} parent=63 // pred_region
          %p867 = scmp.lt.s32.totalorder %s41, 1
          %s868 = scalar_select %p867, %s41, 1
          %s869 = smul.addr %s868, 8
          %s870 = smul.addr %s869, 4
          %s871 = scalar_lea.vmem %s13, %s870
        $region133: #{schnet_forward.1} parent=63 // pred_fallthru
          _
        // Predicated region
        $region134: #{schnet_forward.1} parent=63 // pred_check
          %p872 = pneg %p400
        $region135: #{schnet_forward.1} parent=63 // pred_check_branch
          %874 = sbr.rel (%p872) target = $region137
        $region136: #{schnet_forward.1} parent=63 // pred_region
          %p875 = scmp.lt.s32.totalorder %s41, 1
          %s876 = scalar_select %p875, %s41, 1
          %s877 = scalar_lea.vmem %s14, %s876
        $region137: #{schnet_forward.1} parent=63 // pred_fallthru
          _
        // Predicated region
        $region138: #{schnet_forward.1} parent=63 // pred_check
          %p878 = pneg %p426
        $region139: #{schnet_forward.1} parent=63 // pred_check_branch
          %880 = sbr.rel (%p878) target = $region141
        $region140: #{schnet_forward.1} parent=63 // pred_region
          %p881 = scmp.lt.s32.totalorder %s41, 1
          %s882 = scalar_select %p881, %s41, 1
          %s883 = smul.addr %s882, 4
          %s884 = smul.addr %s883, 4
          %s885 = scalar_lea.vmem %s15, %s884
        $region141: #{schnet_forward.1} parent=63 // pred_fallthru
          _
        // Predicated region
        $region142: #{schnet_forward.1} parent=63 // pred_check
          %p886 = pneg %p452
        $region143: #{schnet_forward.1} parent=63 // pred_check_branch
          %888 = sbr.rel (%p886) target = $region145
        $region144: #{schnet_forward.1} parent=63 // pred_region
          %p889 = scmp.lt.s32.totalorder %s41, 1
          %s890 = scalar_select %p889, %s41, 1
          %s891 = scalar_lea.vmem %s16, %s890
        $region145: #{schnet_forward.1} parent=63 // pred_fallthru
          _
        // Predicated region
        $region146: #{schnet_forward.1} parent=63 // pred_check
          %p892 = pneg %p478
        $region147: #{schnet_forward.1} parent=63 // pred_check_branch
          %894 = sbr.rel (%p892) target = $region149
        $region148: #{schnet_forward.1} parent=63 // pred_region
          %p895 = scmp.lt.s32.totalorder %s41, 1
          %s896 = scalar_select %p895, %s41, 1
          %s897 = smul.addr %s896, 4
          %s898 = smul.addr %s897, 4
          %s899 = scalar_lea.vmem %s17, %s898
        $region149: #{schnet_forward.1} parent=63 // pred_fallthru
          _
        // Predicated region
        $region150: #{schnet_forward.1} parent=63 // pred_check
          %p900 = pneg %p504
        $region151: #{schnet_forward.1} parent=63 // pred_check_branch
          %902 = sbr.rel (%p900) target = $region153
        $region152: #{schnet_forward.1} parent=63 // pred_region
          %p903 = scmp.lt.s32.totalorder %s41, 1
          %s904 = scalar_select %p903, %s41, 1
          %s905 = scalar_lea.vmem %s18, %s904
        $region153: #{schnet_forward.1} parent=63 // pred_fallthru
          _
        // Predicated region
        $region154: #{schnet_forward.1} parent=63 // pred_check
          %p906 = pneg %p530
        $region155: #{schnet_forward.1} parent=63 // pred_check_branch
          %908 = sbr.rel (%p906) target = $region157
        $region156: #{schnet_forward.1} parent=63 // pred_region
          %p909 = scmp.lt.s32.totalorder %s41, 1
          %s910 = scalar_select %p909, %s41, 1
          %s911 = smul.addr %s910, 4
          %s912 = smul.addr %s911, 4
          %s913 = scalar_lea.vmem %s19, %s912
        $region157: #{schnet_forward.1} parent=63 // pred_fallthru
          _
        // Predicated region
        $region158: #{schnet_forward.1} parent=63 // pred_check
          %p914 = pneg %p556
        $region159: #{schnet_forward.1} parent=63 // pred_check_branch
          %916 = sbr.rel (%p914) target = $region161
        $region160: #{schnet_forward.1} parent=63 // pred_region
          %p917 = scmp.lt.s32.totalorder %s41, 1
          %s918 = scalar_select %p917, %s41, 1
          %s919 = scalar_lea.vmem %s20, %s918
        $region161: #{schnet_forward.1} parent=63 // pred_fallthru
          _
      $region64: #{schnet_forward.1} parent=5 // pred_fallthru
        _
      %p920 = scmp.le.s32.totalorder 1, %s34
      %p921 = scmp.lt.s32.totalorder %s34, 5
      %p922 = pnand %p920, %p921
      %p923 = pneg %p922
      // Predicated region
      $region162: #{schnet_forward.1} parent=5 // pred_check
        _
      $region163: #{schnet_forward.1} parent=5 // pred_check_branch
        %925 = sbr.rel (%p922) target = $region165
      $region164: #{schnet_forward.1} parent=5 // pred_region
        %s926 = ssub.s32 %s34, 1
        %s927 = sand.u32 %s111, 1
        %s928 = sand.u32 %s111, 1
        %s929 = smul.addr %s928, 8
        %s930 = scalar_lea.vmem [#allocation5], %s929
        // Predicated region
        $region166: #{schnet_forward.1} parent=164 // pred_check
          %p931 = pneg %p124
        $region167: #{schnet_forward.1} parent=164 // pred_check_branch
          %933 = sbr.rel (%p931) target = $region169
        $region168: #{schnet_forward.1} parent=164 // pred_region
          _
        $region169: #{schnet_forward.1} parent=164 // pred_fallthru
          _
        %s934 = smul.u32 16, %s44
        %p935 = scmp.lt.s32.totalorder %s934, 31
        %s936 = scalar_select %p935, %s934, 31
        %s937 = smul.addr %s936, 8
        %s938 = scalar_lea.vmem %s0, %s937
        %p939 = pneg %p72
        %p940 = pneg %p69
        %s941 = smul.u32 16, %s44
        %p942 = scmp.lt.s32.totalorder %s941, 31
        %s943 = scalar_select %p942, %s941, 31
        %s944 = smul.addr %s943, 4
        %s945 = scalar_lea.vmem %s1, %s944
        %p946 = pneg %p98
        %p947 = pneg %p95
        %s948 = sand.u32 %s111, 1
        %s949 = sand.u32 %s111, 1
        %s950 = smul.addr %s949, 8
        %s951 = scalar_lea.vmem [#allocation5], %s950
        %p952 = pneg %p124
        %p953 = pneg %p121
        %p954 = pneg %p145
        %p955 = pneg %p142
        %p956 = pneg %p166
        %p957 = pneg %p163
        %p958 = pneg %p187
        %p959 = pneg %p184
        %p960 = pneg %p208
        %p961 = pneg %p205
        %p962 = pneg %p229
        %p963 = pneg %p226
        %p964 = pneg %p250
        %p965 = pneg %p247
        %p966 = scmp.lt.s32.totalorder %s43, 1
        %s967 = scalar_select %p966, %s43, 1
        %s968 = smul.addr %s967, 4
        %s969 = smul.addr %s968, 4
        %s970 = scalar_lea.vmem %s9, %s969
        %p971 = pneg %p276
        %p972 = pneg %p273
        %p973 = scmp.lt.s32.totalorder %s43, 1
        %s974 = scalar_select %p973, %s43, 1
        %s975 = scalar_lea.vmem %s10, %s974
        %p976 = pneg %p302
        %p977 = pneg %p299
        %p978 = scmp.lt.s32.totalorder %s43, 1
        %s979 = scalar_select %p978, %s43, 1
        %s980 = smul.addr %s979, 4
        %s981 = smul.addr %s980, 4
        %s982 = scalar_lea.vmem %s11, %s981
        %p983 = pneg %p328
        %p984 = pneg %p325
        %p985 = scmp.lt.s32.totalorder %s43, 1
        %s986 = scalar_select %p985, %s43, 1
        %s987 = scalar_lea.vmem %s12, %s986
        %p988 = pneg %p354
        %p989 = pneg %p351
        %p990 = scmp.lt.s32.totalorder %s43, 1
        %s991 = scalar_select %p990, %s43, 1
        %s992 = smul.addr %s991, 8
        %s993 = smul.addr %s992, 4
        %s994 = scalar_lea.vmem %s13, %s993
        %p995 = pneg %p380
        %p996 = pneg %p377
        %p997 = scmp.lt.s32.totalorder %s43, 1
        %s998 = scalar_select %p997, %s43, 1
        %s999 = scalar_lea.vmem %s14, %s998
        %p1000 = pneg %p406
        %p1001 = pneg %p403
        %p1002 = scmp.lt.s32.totalorder %s43, 1
        %s1003 = scalar_select %p1002, %s43, 1
        %s1004 = smul.addr %s1003, 4
        %s1005 = smul.addr %s1004, 4
        %s1006 = scalar_lea.vmem %s15, %s1005
        %p1007 = pneg %p432
        %p1008 = pneg %p429
        %p1009 = scmp.lt.s32.totalorder %s43, 1
        %s1010 = scalar_select %p1009, %s43, 1
        %s1011 = scalar_lea.vmem %s16, %s1010
        %p1012 = pneg %p458
        %p1013 = pneg %p455
        %p1014 = scmp.lt.s32.totalorder %s43, 1
        %s1015 = scalar_select %p1014, %s43, 1
        %s1016 = smul.addr %s1015, 4
        %s1017 = smul.addr %s1016, 4
        %s1018 = scalar_lea.vmem %s17, %s1017
        %p1019 = pneg %p484
        %p1020 = pneg %p481
        %p1021 = scmp.lt.s32.totalorder %s43, 1
        %s1022 = scalar_select %p1021, %s43, 1
        %s1023 = scalar_lea.vmem %s18, %s1022
        %p1024 = pneg %p510
        %p1025 = pneg %p507
        %p1026 = scmp.lt.s32.totalorder %s43, 1
        %s1027 = scalar_select %p1026, %s43, 1
        %s1028 = smul.addr %s1027, 4
        %s1029 = smul.addr %s1028, 4
        %s1030 = scalar_lea.vmem %s19, %s1029
        %p1031 = pneg %p536
        %p1032 = pneg %p533
        %p1033 = scmp.lt.s32.totalorder %s43, 1
        %s1034 = scalar_select %p1033, %s43, 1
        %s1035 = scalar_lea.vmem %s20, %s1034
        %p1036 = pneg %p562
        %p1037 = pneg %p559
        %p1038 = pneg %p583
        %p1039 = pneg %p580
        %p1040 = pneg %p604
        %p1041 = pneg %p601
        %p1042 = pneg %p625
        %p1043 = pneg %p622
        %p1044 = pneg %p646
        %p1045 = pneg %p643
        %p1046 = pneg %p667
        %p1047 = pneg %p664
        %p1048 = pneg %p688
        %p1049 = pneg %p685
        %p1050 = pneg %p709
        %p1051 = pneg %p706
        %s1052 = smul.u32 16, %s44
        %p1053 = scmp.lt.s32.totalorder %s1052, 31
        %s1054 = scalar_select %p1053, %s1052, 31
        %s1055 = smul.addr %s1054, 8
        %s1056 = scalar_lea.vmem %s0, %s1055
        %s1057 = smul.u32 16, %s44
        %s1058 = smul.u32 16, %s44
        %p1059 = scmp.lt.s32.totalorder %s1058, 31
        %s1060 = scalar_select %p1059, %s1058, 31
        %s1061 = smul.addr %s1060, 4
        %s1062 = scalar_lea.vmem %s1, %s1061
        %s1063 = smul.u32 16, %s44
        %p1064 = scmp.lt.s32.totalorder %s43, 1
        %s1065 = scalar_select %p1064, %s43, 1
        %s1066 = smul.addr %s1065, 4
        %s1067 = smul.addr %s1066, 4
        %s1068 = scalar_lea.vmem %s9, %s1067
        %p1069 = scmp.lt.s32.totalorder %s43, 1
        %s1070 = scalar_select %p1069, %s43, 1
        %s1071 = scalar_lea.vmem %s10, %s1070
        %p1072 = scmp.lt.s32.totalorder %s43, 1
        %s1073 = scalar_select %p1072, %s43, 1
        %s1074 = smul.addr %s1073, 4
        %s1075 = smul.addr %s1074, 4
        %s1076 = scalar_lea.vmem %s11, %s1075
        %p1077 = scmp.lt.s32.totalorder %s43, 1
        %s1078 = scalar_select %p1077, %s43, 1
        %s1079 = scalar_lea.vmem %s12, %s1078
        %p1080 = scmp.lt.s32.totalorder %s43, 1
        %s1081 = scalar_select %p1080, %s43, 1
        %s1082 = smul.addr %s1081, 8
        %s1083 = smul.addr %s1082, 4
        %s1084 = scalar_lea.vmem %s13, %s1083
        %p1085 = scmp.lt.s32.totalorder %s43, 1
        %s1086 = scalar_select %p1085, %s43, 1
        %s1087 = scalar_lea.vmem %s14, %s1086
        %p1088 = scmp.lt.s32.totalorder %s43, 1
        %s1089 = scalar_select %p1088, %s43, 1
        %s1090 = smul.addr %s1089, 4
        %s1091 = smul.addr %s1090, 4
        %s1092 = scalar_lea.vmem %s15, %s1091
        %p1093 = scmp.lt.s32.totalorder %s43, 1
        %s1094 = scalar_select %p1093, %s43, 1
        %s1095 = scalar_lea.vmem %s16, %s1094
        %p1096 = scmp.lt.s32.totalorder %s43, 1
        %s1097 = scalar_select %p1096, %s43, 1
        %s1098 = smul.addr %s1097, 4
        %s1099 = smul.addr %s1098, 4
        %s1100 = scalar_lea.vmem %s17, %s1099
        %p1101 = scmp.lt.s32.totalorder %s43, 1
        %s1102 = scalar_select %p1101, %s43, 1
        %s1103 = scalar_lea.vmem %s18, %s1102
        %p1104 = scmp.lt.s32.totalorder %s43, 1
        %s1105 = scalar_select %p1104, %s43, 1
        %s1106 = smul.addr %s1105, 4
        %s1107 = smul.addr %s1106, 4
        %s1108 = scalar_lea.vmem %s19, %s1107
        %p1109 = scmp.lt.s32.totalorder %s43, 1
        %s1110 = scalar_select %p1109, %s43, 1
        %s1111 = scalar_lea.vmem %s20, %s1110
        %p1113 = scmp.eq.s32.totalorder %s43, 0
        %p1114 = scmp.eq.s32.totalorder %s44, 0
        %p1115 = pnand %p1113, %p1114
        %p1116 = pneg %p1115
        // Predicated region
        $region170: #{schnet_forward.1} parent=164 // pred_check
          _
        $region171: #{schnet_forward.1} parent=164 // pred_check_branch
          %1118 = sbr.rel (%p1115) target = $region173
        $region172: #{schnet_forward.1} parent=164 // pred_region
          %v1119 = vld [vmem:[%s3] sm:$0xff]
          %v1120 = vld [vmem:[%s3 + $0x8] sm:$0xff]
          %v1121 = vld [vmem:[%s4] sm:$0xff]
          %v1122 = vld [vmem:[%s4 + $0x8] sm:$0xff]
          %v1123 = vld [vmem:[%s4 + $0x10] sm:$0xff]
          %v1124 = vld [vmem:[%s4 + $0x18] sm:$0xff]
          %v1125 = vld [vmem:[%s4 + $0x20] sm:$0xff]
          %v1126 = vld [vmem:[%s4 + $0x28] sm:$0xff]
          %v1127 = vld [vmem:[%s4 + $0x30] sm:$0xff]
          %v1128 = vld [vmem:[%s4 + $0x38] sm:$0xff]
          %v1129 = vld [vmem:[%s4 + $0x40] sm:$0xff]
          %v1130 = vld [vmem:[%s4 + $0x48] sm:$0xff]
          %v1131 = vld [vmem:[%s4 + $0x50] sm:$0xff]
          %v1132 = vld [vmem:[%s4 + $0x58] sm:$0xff]
          %v1133 = vld [vmem:[%s4 + $0x60] sm:$0xff]
          %v1134 = vld [vmem:[%s4 + $0x68] sm:$0xff]
          %v1135 = vld [vmem:[%s4 + $0x70] sm:$0xff]
          %v1136 = vld [vmem:[%s4 + $0x78] sm:$0xff]
          %1137 = vmatpush.msra.mxu0 %v1136
          %1138 = vmatpush.msra.mxu0 %v1135
          %1139 = vmatpush.msra.mxu0 %v1134
          %1140 = vmatpush.msra.mxu0 %v1133
          %1141 = vmatpush.msra.mxu0 %v1132
          %1142 = vmatpush.msra.mxu0 %v1131
          %1143 = vmatpush.msra.mxu0 %v1130
          %1144 = vmatpush.msra.mxu0 %v1129
          %1145 = vmatpush.msra.mxu0 %v1128
          %1146 = vmatpush.msra.mxu0 %v1127
          %1147 = vmatpush.msra.mxu0 %v1126
          %1148 = vmatpush.msra.mxu0 %v1125
          %1149 = vmatpush.msra.mxu0 %v1124
          %1150 = vmatpush.msra.mxu0 %v1123
          %1151 = vmatpush.msra.mxu0 %v1122
          %1152 = vmatpush.msra.mxu0 %v1121
          %1153 = vmatmul.f32.gmra.mxu0 %v1119
          %v1154 = vpop.f32.mrf.mxu0
          %v1155 = vadd.f32 0.0, %v1154
          %1156 = vmatmul.f32.gmra.mxu0 %v1120
          %v1157 = vpop.f32.mrf.mxu0
          %v1158 = vadd.f32 0.0, %v1157
          %1159 = vdwg.mxu0
          %vm1160 = vcmask 261120
          %1161 = vst.msk [vmem:[#allocation2] sm:$0xff] %vm1160, %v1155
          %1162 = vst.msk [vmem:[#allocation2 + $0x8] sm:$0xff] %vm1160, %v1158
        $region173: #{schnet_forward.1} parent=164 // pred_fallthru
          _
        // Predicated region
        $region174: #{schnet_forward.1} parent=164 // pred_check
          %p1163 = pneg %p1114
        $region175: #{schnet_forward.1} parent=164 // pred_check_branch
          %1165 = sbr.rel (%p1163) target = $region177
        $region176: #{schnet_forward.1} parent=164 // pred_region
          %v1166 = vld [vmem:[#allocation2] sm:$0xff]
          %v1167 = vld [vmem:[#allocation2 + $0x8] sm:$0xff]
          %v1168 = vpack.c.bf16 %v1167, %v1166
          %v1169 = vld [vmem:[%s1068] sm:$0xf]
          %v1170 = vld [vmem:[%s1068 + $0x4] sm:$0xf]
          %v1171 = vld [vmem:[%s1068 + $0x8] sm:$0xf]
          %v1172 = vld [vmem:[%s1068 + $0xc] sm:$0xf]
          %v1173 = vld [vmem:[%s1071] sm:$0x1]
          %v1175 = vperm.slane %v1173, 0
          %v1181 = vunpack.c.l.b16 %v1169
          %v1182 = vunpack.c.l.b16 %v1170
          %v1183 = vunpack.c.l.b16 %v1171
          %v1184 = vunpack.c.l.b16 %v1172
          %v1185 = vpack.c.b16 %v1182, %v1181
          %v1186 = vpack.c.b16 %v1184, %v1183
          %vm1189 = vcmask 261120
          %v1191 = vsel %vm1189, %v1168, 0
          %1193 = vmatpush.bf16.msra.mxu0 0
          %1194 = vmatpush.bf16.msra.mxu0 0
          %1195 = vmatpush.bf16.msra.mxu0 0
          %1196 = vmatpush.bf16.msra.mxu0 0
          %1197 = vmatpush.bf16.msra.mxu0 0
          %1198 = vmatpush.bf16.msra.mxu0 0
          %1199 = vmatpush.bf16.msra.mxu0 %v1186
          %1200 = vmatpush.bf16.msra.mxu0 %v1185
          %1201 = vmatmul.bf16.gmra.mxu0 %v1191
          %v1202 = vpop.f32.mrf.mxu0
          %v1203 = vadd.f32 %v1175, %v1202
          %v1204 = vpop.f32.mrf.mxu0
          %v1205 = vadd.f32 %v1175, %v1204
          %1206 = vdwg.mxu0
          %v1207 = vmax.f32 %v1203, 0.0
          %v1208 = vmax.f32 %v1205, 0.0
          %v1209 = vand.u32 2147483647, %v1203
          %v1210 = vand.u32 2147483647, %v1205
          %v1211 = vsub.f32 0.0, %v1209
          %v1212 = vsub.f32 0.0, %v1210
          %v1213 = vmul.f32 %v1211, 1.442695
          %v1214 = vpow.pop %v1213
          %v1215 = vmul.f32 %v1212, 1.442695
          %v1216 = vpow.pop %v1215
          %v1217 = vadd.f32 %v1214, 1.0
          %v1218 = vadd.f32 %v1216, 1.0
          %v1219 = vlog2.pop %v1217
          %v1220 = vmul.f32 %v1219, 0.6931472
          %v1221 = vlog2.pop %v1218
          %v1222 = vmul.f32 %v1221, 0.6931472
          %v1223 = vadd.f32 %v1207, %v1220
          %v1224 = vadd.f32 %v1208, %v1222
          %v1225 = vsub.f32 %v1223, 0.6931472
          %v1226 = vsub.f32 %v1224, 0.6931472
          %v1227 = vpack.c.bf16 %v1226, %v1225
          %v1228 = vld [vmem:[%s1076] sm:$0xf]
          %v1229 = vld [vmem:[%s1076 + $0x4] sm:$0xf]
          %v1230 = vld [vmem:[%s1076 + $0x8] sm:$0xf]
          %v1231 = vld [vmem:[%s1076 + $0xc] sm:$0xf]
          %v1232 = vld [vmem:[%s1079] sm:$0x1]
          %v1234 = vperm.slane %v1232, 0
          %v1240 = vunpack.c.l.b16 %v1228
          %v1241 = vunpack.c.l.b16 %v1229
          %v1242 = vunpack.c.l.b16 %v1230
          %v1243 = vunpack.c.l.b16 %v1231
          %v1244 = vpack.c.b16 %v1241, %v1240
          %v1245 = vpack.c.b16 %v1243, %v1242
          %v1249 = vsel %vm1189, %v1227, 0
          %1251 = vmatpush.bf16.msra.mxu0 0
          %1252 = vmatpush.bf16.msra.mxu0 0
          %1253 = vmatpush.bf16.msra.mxu0 0
          %1254 = vmatpush.bf16.msra.mxu0 0
          %1255 = vmatpush.bf16.msra.mxu0 0
          %1256 = vmatpush.bf16.msra.mxu0 0
          %1257 = vmatpush.bf16.msra.mxu0 %v1245
          %1258 = vmatpush.bf16.msra.mxu0 %v1244
          %1259 = vmatmul.bf16.gmra.mxu0 %v1249
          %v1260 = vpop.f32.mrf.mxu0
          %v1261 = vadd.f32 %v1234, %v1260
          %v1262 = vpop.f32.mrf.mxu0
          %v1263 = vadd.f32 %v1234, %v1262
          %1264 = vdwg.mxu0
          %1265 = vst.msk [vmem:[#allocation3] sm:$0xff] %vm1189, %v1261
          %1266 = vst.msk [vmem:[#allocation3 + $0x8] sm:$0xff] %vm1189, %v1263
          %1267 = vst.msk [vmem:[#allocation4] sm:$0xff] %vm1189, 0.0
          %1268 = vst.msk [vmem:[#allocation4 + $0x8] sm:$0xff] %vm1189, 0.0
        $region177: #{schnet_forward.1} parent=164 // pred_fallthru
          _
        %v1269 = vld [vmem:[%s1056] sm:$0xff]
        %v1270 = vld [vmem:[%s1056 + $0x8] sm:$0xff]
        %v1271 = vld [vmem:[%s1056 + $0x10] sm:$0xff]
        %v1272 = vld [vmem:[%s1056 + $0x18] sm:$0xff]
        %v1273 = vld [vmem:[%s1056 + $0x20] sm:$0xff]
        %v1274 = vld [vmem:[%s1056 + $0x28] sm:$0xff]
        %v1275 = vld [vmem:[%s1056 + $0x30] sm:$0xff]
        %v1276 = vld [vmem:[%s1056 + $0x38] sm:$0xff]
        %v1277 = vld [vmem:[%s1056 + $0x40] sm:$0xff]
        %v1278 = vld [vmem:[%s1056 + $0x48] sm:$0xff]
        %v1279 = vld [vmem:[%s1056 + $0x50] sm:$0xff]
        %v1280 = vld [vmem:[%s1056 + $0x58] sm:$0xff]
        %v1281 = vld [vmem:[%s1056 + $0x60] sm:$0xff]
        %v1282 = vld [vmem:[%s1056 + $0x68] sm:$0xff]
        %v1283 = vld [vmem:[%s1056 + $0x70] sm:$0xff]
        %v1284 = vld [vmem:[%s1056 + $0x78] sm:$0xff]
        %v1285 = vlaneseq
        %v1286 = vand.u32 %v1285, 127
        %v1287 = vcvt.s32.f32 %v1286
        %v1288 = vmul.f32 %v1287, 0.1
        %1290 = vset.pattern.permute.xlu0 0
        %1291 = vperm.xlu0 %1290, %v1269
        %v1292 = vpop.permute.xlu0 %1291
        %1295 = vset.pattern.permute.xlu0 0
        %1296 = vperm.xlu0 %1295, %v1270
        %v1297 = vpop.permute.xlu0 %1296
        %1300 = vset.pattern.permute.xlu0 0
        %1301 = vperm.xlu0 %1300, %v1271
        %v1302 = vpop.permute.xlu0 %1301
        %1305 = vset.pattern.permute.xlu0 0
        %1306 = vperm.xlu0 %1305, %v1272
        %v1307 = vpop.permute.xlu0 %1306
        %1310 = vset.pattern.permute.xlu0 0
        %1311 = vperm.xlu0 %1310, %v1273
        %v1312 = vpop.permute.xlu0 %1311
        %1315 = vset.pattern.permute.xlu0 0
        %1316 = vperm.xlu0 %1315, %v1274
        %v1317 = vpop.permute.xlu0 %1316
        %1320 = vset.pattern.permute.xlu0 0
        %1321 = vperm.xlu0 %1320, %v1275
        %v1322 = vpop.permute.xlu0 %1321
        %1325 = vset.pattern.permute.xlu0 0
        %1326 = vperm.xlu0 %1325, %v1276
        %v1327 = vpop.permute.xlu0 %1326
        %1330 = vset.pattern.permute.xlu0 0
        %1331 = vperm.xlu0 %1330, %v1277
        %v1332 = vpop.permute.xlu0 %1331
        %1335 = vset.pattern.permute.xlu0 0
        %1336 = vperm.xlu0 %1335, %v1278
        %v1337 = vpop.permute.xlu0 %1336
        %1340 = vset.pattern.permute.xlu0 0
        %1341 = vperm.xlu0 %1340, %v1279
        %v1342 = vpop.permute.xlu0 %1341
        %1345 = vset.pattern.permute.xlu0 0
        %1346 = vperm.xlu0 %1345, %v1280
        %v1347 = vpop.permute.xlu0 %1346
        %1350 = vset.pattern.permute.xlu0 0
        %1351 = vperm.xlu0 %1350, %v1281
        %v1352 = vpop.permute.xlu0 %1351
        %1355 = vset.pattern.permute.xlu0 0
        %1356 = vperm.xlu0 %1355, %v1282
        %v1357 = vpop.permute.xlu0 %1356
        %1360 = vset.pattern.permute.xlu0 0
        %1361 = vperm.xlu0 %1360, %v1283
        %v1362 = vpop.permute.xlu0 %1361
        %1365 = vset.pattern.permute.xlu0 0
        %1366 = vperm.xlu0 %1365, %v1284
        %v1367 = vpop.permute.xlu0 %1366
        %v1369 = vsub.f32 %v1292, %v1288
        %v1370 = vsub.f32 %v1297, %v1288
        %v1371 = vsub.f32 %v1302, %v1288
        %v1372 = vsub.f32 %v1307, %v1288
        %v1373 = vsub.f32 %v1312, %v1288
        %v1374 = vsub.f32 %v1317, %v1288
        %v1375 = vsub.f32 %v1322, %v1288
        %v1376 = vsub.f32 %v1327, %v1288
        %v1377 = vsub.f32 %v1332, %v1288
        %v1378 = vsub.f32 %v1337, %v1288
        %v1379 = vsub.f32 %v1342, %v1288
        %v1380 = vsub.f32 %v1347, %v1288
        %v1381 = vsub.f32 %v1352, %v1288
        %v1382 = vsub.f32 %v1357, %v1288
        %v1383 = vsub.f32 %v1362, %v1288
        %v1384 = vsub.f32 %v1367, %v1288
        %v1385 = vmul.f32 %v1369, %v1369
        %v1386 = vmul.f32 %v1370, %v1370
        %v1387 = vmul.f32 %v1371, %v1371
        %v1388 = vmul.f32 %v1372, %v1372
        %v1389 = vmul.f32 %v1373, %v1373
        %v1390 = vmul.f32 %v1374, %v1374
        %v1391 = vmul.f32 %v1375, %v1375
        %v1392 = vmul.f32 %v1376, %v1376
        %v1393 = vmul.f32 %v1377, %v1377
        %v1394 = vmul.f32 %v1378, %v1378
        %v1395 = vmul.f32 %v1379, %v1379
        %v1396 = vmul.f32 %v1380, %v1380
        %v1397 = vmul.f32 %v1381, %v1381
        %v1398 = vmul.f32 %v1382, %v1382
        %v1399 = vmul.f32 %v1383, %v1383
        %v1400 = vmul.f32 %v1384, %v1384
        %v1401 = vmul.f32 %v1385, -50.0
        %v1402 = vmul.f32 %v1386, -50.0
        %v1403 = vmul.f32 %v1387, -50.0
        %v1404 = vmul.f32 %v1388, -50.0
        %v1405 = vmul.f32 %v1389, -50.0
        %v1406 = vmul.f32 %v1390, -50.0
        %v1407 = vmul.f32 %v1391, -50.0
        %v1408 = vmul.f32 %v1392, -50.0
        %v1409 = vmul.f32 %v1393, -50.0
        %v1410 = vmul.f32 %v1394, -50.0
        %v1411 = vmul.f32 %v1395, -50.0
        %v1412 = vmul.f32 %v1396, -50.0
        %v1413 = vmul.f32 %v1397, -50.0
        %v1414 = vmul.f32 %v1398, -50.0
        %v1415 = vmul.f32 %v1399, -50.0
        %v1416 = vmul.f32 %v1400, -50.0
        %v1417 = vmul.f32 %v1401, 1.442695
        %v1418 = vpow.pop %v1417
        %v1419 = vmul.f32 %v1402, 1.442695
        %v1420 = vpow.pop %v1419
        %v1421 = vmul.f32 %v1403, 1.442695
        %v1422 = vpow.pop %v1421
        %v1423 = vmul.f32 %v1404, 1.442695
        %v1424 = vpow.pop %v1423
        %v1425 = vmul.f32 %v1405, 1.442695
        %v1426 = vpow.pop %v1425
        %v1427 = vmul.f32 %v1406, 1.442695
        %v1428 = vpow.pop %v1427
        %v1429 = vmul.f32 %v1407, 1.442695
        %v1430 = vpow.pop %v1429
        %v1431 = vmul.f32 %v1408, 1.442695
        %v1432 = vpow.pop %v1431
        %v1433 = vmul.f32 %v1409, 1.442695
        %v1434 = vpow.pop %v1433
        %v1435 = vmul.f32 %v1410, 1.442695
        %v1436 = vpow.pop %v1435
        %v1437 = vmul.f32 %v1411, 1.442695
        %v1438 = vpow.pop %v1437
        %v1439 = vmul.f32 %v1412, 1.442695
        %v1440 = vpow.pop %v1439
        %v1441 = vmul.f32 %v1413, 1.442695
        %v1442 = vpow.pop %v1441
        %v1443 = vmul.f32 %v1414, 1.442695
        %v1444 = vpow.pop %v1443
        %v1445 = vmul.f32 %v1415, 1.442695
        %v1446 = vpow.pop %v1445
        %v1447 = vmul.f32 %v1416, 1.442695
        %v1448 = vpow.pop %v1447
        %v1449 = vpack.c.bf16 %v1420, %v1418
        %v1450 = vpack.c.bf16 %v1424, %v1422
        %v1451 = vpack.c.bf16 %v1428, %v1426
        %v1452 = vpack.c.bf16 %v1432, %v1430
        %v1453 = vpack.c.bf16 %v1436, %v1434
        %v1454 = vpack.c.bf16 %v1440, %v1438
        %v1455 = vpack.c.bf16 %v1444, %v1442
        %v1456 = vpack.c.bf16 %v1448, %v1446
        %v1457 = vld [vmem:[%s1084] sm:$0xf]
        %v1458 = vld [vmem:[%s1084 + $0x4] sm:$0xf]
        %v1459 = vld [vmem:[%s1084 + $0x8] sm:$0xf]
        %v1460 = vld [vmem:[%s1084 + $0xc] sm:$0xf]
        %v1461 = vld [vmem:[%s1084 + $0x10] sm:$0xf]
        %v1462 = vld [vmem:[%s1084 + $0x14] sm:$0xf]
        %v1463 = vld [vmem:[%s1084 + $0x18] sm:$0xf]
        %v1464 = vld [vmem:[%s1084 + $0x1c] sm:$0xf]
        %v1465 = vld [vmem:[%s1087] sm:$0x1]
        %v1467 = vperm.slane %v1465, 0
        %v1477 = vunpack.c.l.b16 %v1457
        %v1478 = vunpack.c.l.b16 %v1458
        %v1479 = vunpack.c.l.b16 %v1459
        %v1480 = vunpack.c.l.b16 %v1460
        %v1481 = vunpack.c.l.b16 %v1461
        %v1482 = vunpack.c.l.b16 %v1462
        %v1483 = vunpack.c.l.b16 %v1463
        %v1484 = vunpack.c.l.b16 %v1464
        %v1485 = vpack.c.b16 %v1478, %v1477
        %v1486 = vpack.c.b16 %v1480, %v1479
        %v1487 = vpack.c.b16 %v1482, %v1481
        %v1488 = vpack.c.b16 %v1484, %v1483
        %vm1493 = vcmask 523264
        %v1495 = vsel %vm1493, %v1449, 0
        %v1498 = vsel %vm1493, %v1450, 0
        %v1501 = vsel %vm1493, %v1451, 0
        %v1504 = vsel %vm1493, %v1452, 0
        %v1507 = vsel %vm1493, %v1453, 0
        %v1510 = vsel %vm1493, %v1454, 0
        %v1513 = vsel %vm1493, %v1455, 0
        %v1516 = vsel %vm1493, %v1456, 0
        %1518 = vmatpush.bf16.msra.mxu0 0
        %1519 = vmatpush.bf16.msra.mxu0 0
        %1520 = vmatpush.bf16.msra.mxu0 0
        %1521 = vmatpush.bf16.msra.mxu0 0
        %1522 = vmatpush.bf16.msra.mxu0 %v1488
        %1523 = vmatpush.bf16.msra.mxu0 %v1487
        %1524 = vmatpush.bf16.msra.mxu0 %v1486
        %1525 = vmatpush.bf16.msra.mxu0 %v1485
        %1526 = vmatmul.bf16.gmra.mxu0 %v1495
        %v1527 = vpop.f32.mrf.mxu0
        %v1528 = vadd.f32 %v1467, %v1527
        %v1529 = vpop.f32.mrf.mxu0
        %v1530 = vadd.f32 %v1467, %v1529
        %1531 = vmatmul.bf16.gmra.mxu0 %v1498
        %v1532 = vpop.f32.mrf.mxu0
        %v1533 = vadd.f32 %v1467, %v1532
        %v1534 = vpop.f32.mrf.mxu0
        %v1535 = vadd.f32 %v1467, %v1534
        %1536 = vmatmul.bf16.gmra.mxu0 %v1501
        %v1537 = vpop.f32.mrf.mxu0
        %v1538 = vadd.f32 %v1467, %v1537
        %v1539 = vpop.f32.mrf.mxu0
        %v1540 = vadd.f32 %v1467, %v1539
        %1541 = vmatmul.bf16.gmra.mxu0 %v1504
        %v1542 = vpop.f32.mrf.mxu0
        %v1543 = vadd.f32 %v1467, %v1542
        %v1544 = vpop.f32.mrf.mxu0
        %v1545 = vadd.f32 %v1467, %v1544
        %1546 = vmatmul.bf16.gmra.mxu0 %v1507
        %v1547 = vpop.f32.mrf.mxu0
        %v1548 = vadd.f32 %v1467, %v1547
        %v1549 = vpop.f32.mrf.mxu0
        %v1550 = vadd.f32 %v1467, %v1549
        %1551 = vmatmul.bf16.gmra.mxu0 %v1510
        %v1552 = vpop.f32.mrf.mxu0
        %v1553 = vadd.f32 %v1467, %v1552
        %v1554 = vpop.f32.mrf.mxu0
        %v1555 = vadd.f32 %v1467, %v1554
        %1556 = vmatmul.bf16.gmra.mxu0 %v1513
        %v1557 = vpop.f32.mrf.mxu0
        %v1558 = vadd.f32 %v1467, %v1557
        %v1559 = vpop.f32.mrf.mxu0
        %v1560 = vadd.f32 %v1467, %v1559
        %1561 = vmatmul.bf16.gmra.mxu0 %v1516
        %v1562 = vpop.f32.mrf.mxu0
        %v1563 = vadd.f32 %v1467, %v1562
        %v1564 = vpop.f32.mrf.mxu0
        %v1565 = vadd.f32 %v1467, %v1564
        %1566 = vdwg.mxu0
        %v1567 = vmax.f32 %v1528, 0.0
        %v1568 = vmax.f32 %v1530, 0.0
        %v1569 = vmax.f32 %v1533, 0.0
        %v1570 = vmax.f32 %v1535, 0.0
        %v1571 = vmax.f32 %v1538, 0.0
        %v1572 = vmax.f32 %v1540, 0.0
        %v1573 = vmax.f32 %v1543, 0.0
        %v1574 = vmax.f32 %v1545, 0.0
        %v1575 = vmax.f32 %v1548, 0.0
        %v1576 = vmax.f32 %v1550, 0.0
        %v1577 = vmax.f32 %v1553, 0.0
        %v1578 = vmax.f32 %v1555, 0.0
        %v1579 = vmax.f32 %v1558, 0.0
        %v1580 = vmax.f32 %v1560, 0.0
        %v1581 = vmax.f32 %v1563, 0.0
        %v1582 = vmax.f32 %v1565, 0.0
        %v1583 = vand.u32 2147483647, %v1528
        %v1584 = vand.u32 2147483647, %v1530
        %v1585 = vand.u32 2147483647, %v1533
        %v1586 = vand.u32 2147483647, %v1535
        %v1587 = vand.u32 2147483647, %v1538
        %v1588 = vand.u32 2147483647, %v1540
        %v1589 = vand.u32 2147483647, %v1543
        %v1590 = vand.u32 2147483647, %v1545
        %v1591 = vand.u32 2147483647, %v1548
        %v1592 = vand.u32 2147483647, %v1550
        %v1593 = vand.u32 2147483647, %v1553
        %v1594 = vand.u32 2147483647, %v1555
        %v1595 = vand.u32 2147483647, %v1558
        %v1596 = vand.u32 2147483647, %v1560
        %v1597 = vand.u32 2147483647, %v1563
        %v1598 = vand.u32 2147483647, %v1565
        %v1599 = vsub.f32 0.0, %v1583
        %v1600 = vsub.f32 0.0, %v1584
        %v1601 = vsub.f32 0.0, %v1585
        %v1602 = vsub.f32 0.0, %v1586
        %v1603 = vsub.f32 0.0, %v1587
        %v1604 = vsub.f32 0.0, %v1588
        %v1605 = vsub.f32 0.0, %v1589
        %v1606 = vsub.f32 0.0, %v1590
        %v1607 = vsub.f32 0.0, %v1591
        %v1608 = vsub.f32 0.0, %v1592
        %v1609 = vsub.f32 0.0, %v1593
        %v1610 = vsub.f32 0.0, %v1594
        %v1611 = vsub.f32 0.0, %v1595
        %v1612 = vsub.f32 0.0, %v1596
        %v1613 = vsub.f32 0.0, %v1597
        %v1614 = vsub.f32 0.0, %v1598
        %v1615 = vmul.f32 %v1599, 1.442695
        %v1616 = vpow.pop %v1615
        %v1617 = vmul.f32 %v1600, 1.442695
        %v1618 = vpow.pop %v1617
        %v1619 = vmul.f32 %v1601, 1.442695
        %v1620 = vpow.pop %v1619
        %v1621 = vmul.f32 %v1602, 1.442695
        %v1622 = vpow.pop %v1621
        %v1623 = vmul.f32 %v1603, 1.442695
        %v1624 = vpow.pop %v1623
        %v1625 = vmul.f32 %v1604, 1.442695
        %v1626 = vpow.pop %v1625
        %v1627 = vmul.f32 %v1605, 1.442695
        %v1628 = vpow.pop %v1627
        %v1629 = vmul.f32 %v1606, 1.442695
        %v1630 = vpow.pop %v1629
        %v1631 = vmul.f32 %v1607, 1.442695
        %v1632 = vpow.pop %v1631
        %v1633 = vmul.f32 %v1608, 1.442695
        %v1634 = vpow.pop %v1633
        %v1635 = vmul.f32 %v1609, 1.442695
        %v1636 = vpow.pop %v1635
        %v1637 = vmul.f32 %v1610, 1.442695
        %v1638 = vpow.pop %v1637
        %v1639 = vmul.f32 %v1611, 1.442695
        %v1640 = vpow.pop %v1639
        %v1641 = vmul.f32 %v1612, 1.442695
        %v1642 = vpow.pop %v1641
        %v1643 = vmul.f32 %v1613, 1.442695
        %v1644 = vpow.pop %v1643
        %v1645 = vmul.f32 %v1614, 1.442695
        %v1646 = vpow.pop %v1645
        %v1647 = vadd.f32 %v1616, 1.0
        %v1648 = vadd.f32 %v1618, 1.0
        %v1649 = vadd.f32 %v1620, 1.0
        %v1650 = vadd.f32 %v1622, 1.0
        %v1651 = vadd.f32 %v1624, 1.0
        %v1652 = vadd.f32 %v1626, 1.0
        %v1653 = vadd.f32 %v1628, 1.0
        %v1654 = vadd.f32 %v1630, 1.0
        %v1655 = vadd.f32 %v1632, 1.0
        %v1656 = vadd.f32 %v1634, 1.0
        %v1657 = vadd.f32 %v1636, 1.0
        %v1658 = vadd.f32 %v1638, 1.0
        %v1659 = vadd.f32 %v1640, 1.0
        %v1660 = vadd.f32 %v1642, 1.0
        %v1661 = vadd.f32 %v1644, 1.0
        %v1662 = vadd.f32 %v1646, 1.0
        %v1663 = vlog2.pop %v1647
        %v1664 = vmul.f32 %v1663, 0.6931472
        %v1665 = vlog2.pop %v1648
        %v1666 = vmul.f32 %v1665, 0.6931472
        %v1667 = vlog2.pop %v1649
        %v1668 = vmul.f32 %v1667, 0.6931472
        %v1669 = vlog2.pop %v1650
        %v1670 = vmul.f32 %v1669, 0.6931472
        %v1671 = vlog2.pop %v1651
        %v1672 = vmul.f32 %v1671, 0.6931472
        %v1673 = vlog2.pop %v1652
        %v1674 = vmul.f32 %v1673, 0.6931472
        %v1675 = vlog2.pop %v1653
        %v1676 = vmul.f32 %v1675, 0.6931472
        %v1677 = vlog2.pop %v1654
        %v1678 = vmul.f32 %v1677, 0.6931472
        %v1679 = vlog2.pop %v1655
        %v1680 = vmul.f32 %v1679, 0.6931472
        %v1681 = vlog2.pop %v1656
        %v1682 = vmul.f32 %v1681, 0.6931472
        %v1683 = vlog2.pop %v1657
        %v1684 = vmul.f32 %v1683, 0.6931472
        %v1685 = vlog2.pop %v1658
        %v1686 = vmul.f32 %v1685, 0.6931472
        %v1687 = vlog2.pop %v1659
        %v1688 = vmul.f32 %v1687, 0.6931472
        %v1689 = vlog2.pop %v1660
        %v1690 = vmul.f32 %v1689, 0.6931472
        %v1691 = vlog2.pop %v1661
        %v1692 = vmul.f32 %v1691, 0.6931472
        %v1693 = vlog2.pop %v1662
        %v1694 = vmul.f32 %v1693, 0.6931472
        %v1695 = vadd.f32 %v1567, %v1664
        %v1696 = vadd.f32 %v1568, %v1666
        %v1697 = vadd.f32 %v1569, %v1668
        %v1698 = vadd.f32 %v1570, %v1670
        %v1699 = vadd.f32 %v1571, %v1672
        %v1700 = vadd.f32 %v1572, %v1674
        %v1701 = vadd.f32 %v1573, %v1676
        %v1702 = vadd.f32 %v1574, %v1678
        %v1703 = vadd.f32 %v1575, %v1680
        %v1704 = vadd.f32 %v1576, %v1682
        %v1705 = vadd.f32 %v1577, %v1684
        %v1706 = vadd.f32 %v1578, %v1686
        %v1707 = vadd.f32 %v1579, %v1688
        %v1708 = vadd.f32 %v1580, %v1690
        %v1709 = vadd.f32 %v1581, %v1692
        %v1710 = vadd.f32 %v1582, %v1694
        %v1711 = vsub.f32 %v1695, 0.6931472
        %v1712 = vsub.f32 %v1696, 0.6931472
        %v1713 = vsub.f32 %v1697, 0.6931472
        %v1714 = vsub.f32 %v1698, 0.6931472
        %v1715 = vsub.f32 %v1699, 0.6931472
        %v1716 = vsub.f32 %v1700, 0.6931472
        %v1717 = vsub.f32 %v1701, 0.6931472
        %v1718 = vsub.f32 %v1702, 0.6931472
        %v1719 = vsub.f32 %v1703, 0.6931472
        %v1720 = vsub.f32 %v1704, 0.6931472
        %v1721 = vsub.f32 %v1705, 0.6931472
        %v1722 = vsub.f32 %v1706, 0.6931472
        %v1723 = vsub.f32 %v1707, 0.6931472
        %v1724 = vsub.f32 %v1708, 0.6931472
        %v1725 = vsub.f32 %v1709, 0.6931472
        %v1726 = vsub.f32 %v1710, 0.6931472
        %v1727 = vpack.c.bf16 %v1712, %v1711
        %v1728 = vpack.c.bf16 %v1714, %v1713
        %v1729 = vpack.c.bf16 %v1716, %v1715
        %v1730 = vpack.c.bf16 %v1718, %v1717
        %v1731 = vpack.c.bf16 %v1720, %v1719
        %v1732 = vpack.c.bf16 %v1722, %v1721
        %v1733 = vpack.c.bf16 %v1724, %v1723
        %v1734 = vpack.c.bf16 %v1726, %v1725
        %v1735 = vld [vmem:[%s1092] sm:$0xf]
        %v1736 = vld [vmem:[%s1092 + $0x4] sm:$0xf]
        %v1737 = vld [vmem:[%s1092 + $0x8] sm:$0xf]
        %v1738 = vld [vmem:[%s1092 + $0xc] sm:$0xf]
        %v1739 = vld [vmem:[%s1095] sm:$0x1]
        %v1741 = vperm.slane %v1739, 0
        %v1747 = vunpack.c.l.b16 %v1735
        %v1748 = vunpack.c.l.b16 %v1736
        %v1749 = vunpack.c.l.b16 %v1737
        %v1750 = vunpack.c.l.b16 %v1738
        %v1751 = vpack.c.b16 %v1748, %v1747
        %v1752 = vpack.c.b16 %v1750, %v1749
        %vm1755 = vcmask 261120
        %v1757 = vsel %vm1755, %v1727, 0
        %v1760 = vsel %vm1755, %v1728, 0
        %v1763 = vsel %vm1755, %v1729, 0
        %v1766 = vsel %vm1755, %v1730, 0
        %v1769 = vsel %vm1755, %v1731, 0
        %v1772 = vsel %vm1755, %v1732, 0
        %v1775 = vsel %vm1755, %v1733, 0
        %v1778 = vsel %vm1755, %v1734, 0
        %1780 = vmatpush.bf16.msra.mxu0 0
        %1781 = vmatpush.bf16.msra.mxu0 0
        %1782 = vmatpush.bf16.msra.mxu0 0
        %1783 = vmatpush.bf16.msra.mxu0 0
        %1784 = vmatpush.bf16.msra.mxu0 0
        %1785 = vmatpush.bf16.msra.mxu0 0
        %1786 = vmatpush.bf16.msra.mxu0 %v1752
        %1787 = vmatpush.bf16.msra.mxu0 %v1751
        %1788 = vmatmul.bf16.gmra.mxu0 %v1757
        %v1789 = vpop.f32.mrf.mxu0
        %v1790 = vadd.f32 %v1741, %v1789
        %v1791 = vpop.f32.mrf.mxu0
        %v1792 = vadd.f32 %v1741, %v1791
        %1793 = vmatmul.bf16.gmra.mxu0 %v1760
        %v1794 = vpop.f32.mrf.mxu0
        %v1795 = vadd.f32 %v1741, %v1794
        %v1796 = vpop.f32.mrf.mxu0
        %v1797 = vadd.f32 %v1741, %v1796
        %1798 = vmatmul.bf16.gmra.mxu0 %v1763
        %v1799 = vpop.f32.mrf.mxu0
        %v1800 = vadd.f32 %v1741, %v1799
        %v1801 = vpop.f32.mrf.mxu0
        %v1802 = vadd.f32 %v1741, %v1801
        %1803 = vmatmul.bf16.gmra.mxu0 %v1766
        %v1804 = vpop.f32.mrf.mxu0
        %v1805 = vadd.f32 %v1741, %v1804
        %v1806 = vpop.f32.mrf.mxu0
        %v1807 = vadd.f32 %v1741, %v1806
        %1808 = vmatmul.bf16.gmra.mxu0 %v1769
        %v1809 = vpop.f32.mrf.mxu0
        %v1810 = vadd.f32 %v1741, %v1809
        %v1811 = vpop.f32.mrf.mxu0
        %v1812 = vadd.f32 %v1741, %v1811
        %1813 = vmatmul.bf16.gmra.mxu0 %v1772
        %v1814 = vpop.f32.mrf.mxu0
        %v1815 = vadd.f32 %v1741, %v1814
        %v1816 = vpop.f32.mrf.mxu0
        %v1817 = vadd.f32 %v1741, %v1816
        %1818 = vmatmul.bf16.gmra.mxu0 %v1775
        %v1819 = vpop.f32.mrf.mxu0
        %v1820 = vadd.f32 %v1741, %v1819
        %v1821 = vpop.f32.mrf.mxu0
        %v1822 = vadd.f32 %v1741, %v1821
        %1823 = vmatmul.bf16.gmra.mxu0 %v1778
        %v1824 = vpop.f32.mrf.mxu0
        %v1825 = vadd.f32 %v1741, %v1824
        %v1826 = vpop.f32.mrf.mxu0
        %v1827 = vadd.f32 %v1741, %v1826
        %1828 = vdwg.mxu0
        %v1829 = vld [vmem:[%s1062] sm:$0xf]
        %v1830 = vld [vmem:[%s1062 + $0x4] sm:$0xf]
        %v1831 = vld [vmem:[%s1062 + $0x8] sm:$0xf]
        %v1832 = vld [vmem:[%s1062 + $0xc] sm:$0xf]
        %v1833 = vld [vmem:[%s1062 + $0x10] sm:$0xf]
        %v1834 = vld [vmem:[%s1062 + $0x14] sm:$0xf]
        %v1835 = vld [vmem:[%s1062 + $0x18] sm:$0xf]
        %v1836 = vld [vmem:[%s1062 + $0x1c] sm:$0xf]
        %v1837 = vld [vmem:[%s1062 + $0x20] sm:$0xf]
        %v1838 = vld [vmem:[%s1062 + $0x24] sm:$0xf]
        %v1839 = vld [vmem:[%s1062 + $0x28] sm:$0xf]
        %v1840 = vld [vmem:[%s1062 + $0x2c] sm:$0xf]
        %v1841 = vld [vmem:[%s1062 + $0x30] sm:$0xf]
        %v1842 = vld [vmem:[%s1062 + $0x34] sm:$0xf]
        %v1843 = vld [vmem:[%s1062 + $0x38] sm:$0xf]
        %v1844 = vld [vmem:[%s1062 + $0x3c] sm:$0xf]
        %v1845 = vld [vmem:[#allocation3] sm:$0xff]
        %v1846 = vld [vmem:[#allocation3 + $0x8] sm:$0xff]
        %v1847 = vpack.c.bf16 %v1846, %v1845
        %v1864 = vunpack.c.l.b16 %v1829
        %v1865 = vunpack.c.l.b16 %v1830
        %v1866 = vunpack.c.l.b16 %v1831
        %v1867 = vunpack.c.l.b16 %v1832
        %v1868 = vunpack.c.l.b16 %v1833
        %v1869 = vunpack.c.l.b16 %v1834
        %v1870 = vunpack.c.l.b16 %v1835
        %v1871 = vunpack.c.l.b16 %v1836
        %v1872 = vunpack.c.l.b16 %v1837
        %v1873 = vunpack.c.l.b16 %v1838
        %v1874 = vunpack.c.l.b16 %v1839
        %v1875 = vunpack.c.l.b16 %v1840
        %v1876 = vunpack.c.l.b16 %v1841
        %v1877 = vunpack.c.l.b16 %v1842
        %v1878 = vunpack.c.l.b16 %v1843
        %v1879 = vunpack.c.l.b16 %v1844
        %v1880 = vpack.c.b16 %v1865, %v1864
        %v1881 = vpack.c.b16 %v1867, %v1866
        %v1882 = vpack.c.b16 %v1869, %v1868
        %v1883 = vpack.c.b16 %v1871, %v1870
        %v1884 = vpack.c.b16 %v1873, %v1872
        %v1885 = vpack.c.b16 %v1875, %v1874
        %v1886 = vpack.c.b16 %v1877, %v1876
        %v1887 = vpack.c.b16 %v1879, %v1878
        %vm1888 = vcmask 130048
        %v1890 = vsel %vm1888, %v1880, 0
        %v1893 = vsel %vm1888, %v1881, 0
        %v1896 = vsel %vm1888, %v1882, 0
        %v1899 = vsel %vm1888, %v1883, 0
        %v1902 = vsel %vm1888, %v1884, 0
        %v1905 = vsel %vm1888, %v1885, 0
        %v1908 = vsel %vm1888, %v1886, 0
        %v1911 = vsel %vm1888, %v1887, 0
        %1913 = vmatpush.bf16.msra.mxu0 0
        %1914 = vmatpush.bf16.msra.mxu0 0
        %1915 = vmatpush.bf16.msra.mxu0 0
        %1916 = vmatpush.bf16.msra.mxu0 0
        %1917 = vmatpush.bf16.msra.mxu0 0
        %1918 = vmatpush.bf16.msra.mxu0 0
        %1919 = vmatpush.bf16.msra.mxu0 0
        %1920 = vmatpush.bf16.msra.mxu0 %v1847
        %1921 = vmatmul.bf16.gmra.mxu0 %v1890
        %v1922 = vpop.f32.mrf.mxu0
        %v1923 = vadd.f32 0.0, %v1922
        %v1924 = vpop.f32.mrf.mxu0
        %v1925 = vadd.f32 0.0, %v1924
        %1926 = vmatmul.bf16.gmra.mxu0 %v1893
        %v1927 = vpop.f32.mrf.mxu0
        %v1928 = vadd.f32 0.0, %v1927
        %v1929 = vpop.f32.mrf.mxu0
        %v1930 = vadd.f32 0.0, %v1929
        %1931 = vmatmul.bf16.gmra.mxu0 %v1896
        %v1932 = vpop.f32.mrf.mxu0
        %v1933 = vadd.f32 0.0, %v1932
        %v1934 = vpop.f32.mrf.mxu0
        %v1935 = vadd.f32 0.0, %v1934
        %1936 = vmatmul.bf16.gmra.mxu0 %v1899
        %v1937 = vpop.f32.mrf.mxu0
        %v1938 = vadd.f32 0.0, %v1937
        %v1939 = vpop.f32.mrf.mxu0
        %v1940 = vadd.f32 0.0, %v1939
        %1941 = vmatmul.bf16.gmra.mxu0 %v1902
        %v1942 = vpop.f32.mrf.mxu0
        %v1943 = vadd.f32 0.0, %v1942
        %v1944 = vpop.f32.mrf.mxu0
        %v1945 = vadd.f32 0.0, %v1944
        %1946 = vmatmul.bf16.gmra.mxu0 %v1905
        %v1947 = vpop.f32.mrf.mxu0
        %v1948 = vadd.f32 0.0, %v1947
        %v1949 = vpop.f32.mrf.mxu0
        %v1950 = vadd.f32 0.0, %v1949
        %1951 = vmatmul.bf16.gmra.mxu0 %v1908
        %v1952 = vpop.f32.mrf.mxu0
        %v1953 = vadd.f32 0.0, %v1952
        %v1954 = vpop.f32.mrf.mxu0
        %v1955 = vadd.f32 0.0, %v1954
        %1956 = vmatmul.bf16.gmra.mxu0 %v1911
        %v1957 = vpop.f32.mrf.mxu0
        %v1958 = vadd.f32 0.0, %v1957
        %v1959 = vpop.f32.mrf.mxu0
        %v1960 = vadd.f32 0.0, %v1959
        %1961 = vdwg.mxu0
        %v1962 = vmul.f32 %v1923, %v1790
        %v1963 = vmul.f32 %v1925, %v1792
        %v1964 = vmul.f32 %v1928, %v1795
        %v1965 = vmul.f32 %v1930, %v1797
        %v1966 = vmul.f32 %v1933, %v1800
        %v1967 = vmul.f32 %v1935, %v1802
        %v1968 = vmul.f32 %v1938, %v1805
        %v1969 = vmul.f32 %v1940, %v1807
        %v1970 = vmul.f32 %v1943, %v1810
        %v1971 = vmul.f32 %v1945, %v1812
        %v1972 = vmul.f32 %v1948, %v1815
        %v1973 = vmul.f32 %v1950, %v1817
        %v1974 = vmul.f32 %v1953, %v1820
        %v1975 = vmul.f32 %v1955, %v1822
        %v1976 = vmul.f32 %v1958, %v1825
        %v1977 = vmul.f32 %v1960, %v1827
        %v1978 = vld [vmem:[#allocation4] sm:$0xff]
        %v1979 = vld [vmem:[#allocation4 + $0x8] sm:$0xff]
        %v1980 = vld [vmem:[%s930] sm:$0xf]
        %v1981 = vld [vmem:[%s930 + $0x4] sm:$0xf]
        %v1982 = vpack.c.bf16 %v1963, %v1962
        %v1983 = vpack.c.bf16 %v1965, %v1964
        %v1984 = vpack.c.bf16 %v1967, %v1966
        %v1985 = vpack.c.bf16 %v1969, %v1968
        %v1986 = vpack.c.bf16 %v1971, %v1970
        %v1987 = vpack.c.bf16 %v1973, %v1972
        %v1988 = vpack.c.bf16 %v1975, %v1974
        %v1989 = vpack.c.bf16 %v1977, %v1976
        %v1992 = vunpack.c.l.b16 %v1980
        %v1993 = vunpack.c.l.b16 %v1981
        %v1994 = vpack.c.b16 %v1993, %v1992
        %1996 = vmatpush.bf16.msra.mxu0 %v1989
        %1997 = vmatpush.bf16.msra.mxu0 %v1988
        %1998 = vmatpush.bf16.msra.mxu0 %v1987
        %1999 = vmatpush.bf16.msra.mxu0 %v1986
        %2000 = vmatpush.bf16.msra.mxu0 %v1985
        %2001 = vmatpush.bf16.msra.mxu0 %v1984
        %2002 = vmatpush.bf16.msra.mxu0 %v1983
        %2003 = vmatpush.bf16.msra.mxu0 %v1982
        %2004 = vmatmul.bf16.gmra.mxu0 %v1994
        %v2005 = vpop.f32.mrf.mxu0
        %v2006 = vadd.f32 0.0, %v2005
        %v2007 = vpop.f32.mrf.mxu0
        %v2008 = vadd.f32 0.0, %v2007
        %2009 = vdwg.mxu0
        %v2010 = vadd.f32 %v1978, %v2006
        %v2011 = vadd.f32 %v1979, %v2008
        %2012 = vst.msk [vmem:[#allocation4] sm:$0xff] %vm1755, %v2010
        %2013 = vst.msk [vmem:[#allocation4 + $0x8] sm:$0xff] %vm1755, %v2011
        %p2014 = scmp.eq.s32.totalorder %s44, 1
        // Predicated region
        $region178: #{schnet_forward.1} parent=164 // pred_check
          %p2015 = pneg %p2014
        $region179: #{schnet_forward.1} parent=164 // pred_check_branch
          %2017 = sbr.rel (%p2015) target = $region181
        $region180: #{schnet_forward.1} parent=164 // pred_region
          %v2018 = vld [vmem:[#allocation4] sm:$0xff]
          %v2019 = vld [vmem:[#allocation4 + $0x8] sm:$0xff]
          %v2020 = vpack.c.bf16 %v2019, %v2018
          %v2021 = vld [vmem:[%s1100] sm:$0xf]
          %v2022 = vld [vmem:[%s1100 + $0x4] sm:$0xf]
          %v2023 = vld [vmem:[%s1100 + $0x8] sm:$0xf]
          %v2024 = vld [vmem:[%s1100 + $0xc] sm:$0xf]
          %v2025 = vld [vmem:[%s1103] sm:$0x1]
          %v2027 = vperm.slane %v2025, 0
          %v2033 = vunpack.c.l.b16 %v2021
          %v2034 = vunpack.c.l.b16 %v2022
          %v2035 = vunpack.c.l.b16 %v2023
          %v2036 = vunpack.c.l.b16 %v2024
          %v2037 = vpack.c.b16 %v2034, %v2033
          %v2038 = vpack.c.b16 %v2036, %v2035
          %v2042 = vsel %vm1755, %v2020, 0
          %2044 = vmatpush.bf16.msra.mxu0 0
          %2045 = vmatpush.bf16.msra.mxu0 0
          %2046 = vmatpush.bf16.msra.mxu0 0
          %2047 = vmatpush.bf16.msra.mxu0 0
          %2048 = vmatpush.bf16.msra.mxu0 0
          %2049 = vmatpush.bf16.msra.mxu0 0
          %2050 = vmatpush.bf16.msra.mxu0 %v2038
          %2051 = vmatpush.bf16.msra.mxu0 %v2037
          %2052 = vmatmul.bf16.gmra.mxu0 %v2042
          %v2053 = vpop.f32.mrf.mxu0
          %v2054 = vadd.f32 %v2027, %v2053
          %v2055 = vpop.f32.mrf.mxu0
          %v2056 = vadd.f32 %v2027, %v2055
          %2057 = vdwg.mxu0
          %v2058 = vmax.f32 %v2054, 0.0
          %v2059 = vmax.f32 %v2056, 0.0
          %v2060 = vand.u32 2147483647, %v2054
          %v2061 = vand.u32 2147483647, %v2056
          %v2062 = vsub.f32 0.0, %v2060
          %v2063 = vsub.f32 0.0, %v2061
          %v2064 = vmul.f32 %v2062, 1.442695
          %v2065 = vpow.pop %v2064
          %v2066 = vmul.f32 %v2063, 1.442695
          %v2067 = vpow.pop %v2066
          %v2068 = vadd.f32 %v2065, 1.0
          %v2069 = vadd.f32 %v2067, 1.0
          %v2070 = vlog2.pop %v2068
          %v2071 = vmul.f32 %v2070, 0.6931472
          %v2072 = vlog2.pop %v2069
          %v2073 = vmul.f32 %v2072, 0.6931472
          %v2074 = vadd.f32 %v2058, %v2071
          %v2075 = vadd.f32 %v2059, %v2073
          %v2076 = vsub.f32 %v2074, 0.6931472
          %v2077 = vsub.f32 %v2075, 0.6931472
          %v2078 = vpack.c.bf16 %v2077, %v2076
          %v2079 = vld [vmem:[%s1108] sm:$0xf]
          %v2080 = vld [vmem:[%s1108 + $0x4] sm:$0xf]
          %v2081 = vld [vmem:[%s1108 + $0x8] sm:$0xf]
          %v2082 = vld [vmem:[%s1108 + $0xc] sm:$0xf]
          %v2083 = vld [vmem:[%s1111] sm:$0x1]
          %v2085 = vperm.slane %v2083, 0
          %v2091 = vunpack.c.l.b16 %v2079
          %v2092 = vunpack.c.l.b16 %v2080
          %v2093 = vunpack.c.l.b16 %v2081
          %v2094 = vunpack.c.l.b16 %v2082
          %v2095 = vpack.c.b16 %v2092, %v2091
          %v2096 = vpack.c.b16 %v2094, %v2093
          %v2100 = vsel %vm1755, %v2078, 0
          %2102 = vmatpush.bf16.msra.mxu0 0
          %2103 = vmatpush.bf16.msra.mxu0 0
          %2104 = vmatpush.bf16.msra.mxu0 0
          %2105 = vmatpush.bf16.msra.mxu0 0
          %2106 = vmatpush.bf16.msra.mxu0 0
          %2107 = vmatpush.bf16.msra.mxu0 0
          %2108 = vmatpush.bf16.msra.mxu0 %v2096
          %2109 = vmatpush.bf16.msra.mxu0 %v2095
          %2110 = vmatmul.bf16.gmra.mxu0 %v2100
          %v2111 = vpop.f32.mrf.mxu0
          %v2112 = vadd.f32 %v2085, %v2111
          %v2113 = vpop.f32.mrf.mxu0
          %v2114 = vadd.f32 %v2085, %v2113
          %2115 = vdwg.mxu0
          %v2116 = vld [vmem:[#allocation2] sm:$0xff]
          %v2117 = vld [vmem:[#allocation2 + $0x8] sm:$0xff]
          %v2118 = vadd.f32 %v2116, %v2112
          %v2119 = vadd.f32 %v2117, %v2114
          %2120 = vst.msk [vmem:[#allocation2] sm:$0xff] %vm1755, %v2118
          %2121 = vst.msk [vmem:[#allocation2 + $0x8] sm:$0xff] %vm1755, %v2119
        $region181: #{schnet_forward.1} parent=164 // pred_fallthru
          _
        %p2122 = scmp.eq.s32.totalorder %s43, 1
        %p2123 = pnand %p2122, %p2014
        %p2124 = pneg %p2123
        // Predicated region
        $region182: #{schnet_forward.1} parent=164 // pred_check
          _
        $region183: #{schnet_forward.1} parent=164 // pred_check_branch
          %2126 = sbr.rel (%p2123) target = $region185
        $region184: #{schnet_forward.1} parent=164 // pred_region
          %v2127 = vld [vmem:[#allocation2] sm:$0xff]
          %v2128 = vld [vmem:[#allocation2 + $0x8] sm:$0xff]
          %v2129 = vld [vmem:[%s5] sm:$0xff]
          %v2130 = vld [vmem:[%s5 + $0x8] sm:$0xff]
          %v2132 = vsel %vm1888, %v2129, 0
          %v2135 = vsel %vm1888, %v2130, 0
          %2137 = vmatpush.msra.mxu0 0.0
          %2138 = vmatpush.msra.mxu0 0.0
          %2139 = vmatpush.msra.mxu0 0.0
          %2140 = vmatpush.msra.mxu0 0.0
          %2141 = vmatpush.msra.mxu0 0.0
          %2142 = vmatpush.msra.mxu0 0.0
          %2143 = vmatpush.msra.mxu0 0.0
          %2144 = vmatpush.msra.mxu0 0.0
          %2145 = vmatpush.msra.mxu0 0.0
          %2146 = vmatpush.msra.mxu0 0.0
          %2147 = vmatpush.msra.mxu0 0.0
          %2148 = vmatpush.msra.mxu0 0.0
          %2149 = vmatpush.msra.mxu0 0.0
          %2150 = vmatpush.msra.mxu0 0.0
          %2151 = vmatpush.msra.mxu0 %v2128
          %2152 = vmatpush.msra.mxu0 %v2127
          %2153 = vmatmul.f32.gmra.mxu0 %v2132
          %v2154 = vpop.f32.mrf.mxu0
          %v2155 = vadd.f32 0.0, %v2154
          %2156 = vmatmul.f32.gmra.mxu0 %v2135
          %v2157 = vpop.f32.mrf.mxu0
          %v2158 = vadd.f32 0.0, %v2157
          %2159 = vdwg.mxu0
          %v2160 = vld [vmem:[%s6] sm:$0xff]
          %v2161 = vld [vmem:[%s6 + $0x8] sm:$0xff]
          %v2162 = vld [vmem:[%s22] sm:$0x7]
          %2164 = vset.pattern.permute.xlu0 0
          %2165 = vperm.xlu0 %2164, %v2160
          %v2166 = vpop.permute.xlu0 %2165
          %2169 = vset.pattern.permute.xlu0 0
          %2170 = vperm.xlu0 %2169, %v2161
          %v2171 = vpop.permute.xlu0 %2170
          %v2173 = vperm.slane %v2162, 0
          %v2174 = vmul.f32 %v2166, %v2173
          %v2175 = vmul.f32 %v2171, %v2173
          %2176 = vset.pattern.permute.xlu0 1
          %2177 = vperm.xlu0 %2176, %v2160
          %v2178 = vpop.permute.xlu0 %2177
          %2180 = vset.pattern.permute.xlu0 1
          %2181 = vperm.xlu0 %2180, %v2161
          %v2182 = vpop.permute.xlu0 %2181
          %v2184 = vperm.slane %v2162, 1
          %v2185 = vmul.f32 %v2178, %v2184
          %v2186 = vmul.f32 %v2182, %v2184
          %v2187 = vadd.f32 %v2174, %v2185
          %v2188 = vadd.f32 %v2175, %v2186
          %2189 = vset.pattern.permute.xlu0 2
          %2190 = vperm.xlu0 %2189, %v2160
          %v2191 = vpop.permute.xlu0 %2190
          %2193 = vset.pattern.permute.xlu0 2
          %2194 = vperm.xlu0 %2193, %v2161
          %v2195 = vpop.permute.xlu0 %2194
          %v2197 = vperm.slane %v2162, 2
          %v2198 = vmul.f32 %v2191, %v2197
          %v2199 = vmul.f32 %v2195, %v2197
          %v2200 = vadd.f32 %v2187, %v2198
          %v2201 = vadd.f32 %v2188, %v2199
          %v2202 = vpack.c.bf16 %v2158, %v2155
          %v2203 = vld [vmem:[%s21] sm:$0xf]
          %v2204 = vld [vmem:[%s21 + $0x4] sm:$0xf]
          %v2205 = vld [vmem:[%s21 + $0x8] sm:$0xf]
          %v2206 = vld [vmem:[%s21 + $0xc] sm:$0xf]
          %v2211 = vunpack.c.l.b16 %v2203
          %v2212 = vunpack.c.l.b16 %v2204
          %v2213 = vunpack.c.l.b16 %v2205
          %v2214 = vunpack.c.l.b16 %v2206
          %v2215 = vpack.c.b16 %v2212, %v2211
          %v2216 = vpack.c.b16 %v2214, %v2213
          %v2220 = vsel %vm1755, %v2202, 0
          %2222 = vmatpush.bf16.msra.mxu0 0
          %2223 = vmatpush.bf16.msra.mxu0 0
          %2224 = vmatpush.bf16.msra.mxu0 0
          %2225 = vmatpush.bf16.msra.mxu0 0
          %2226 = vmatpush.bf16.msra.mxu0 0
          %2227 = vmatpush.bf16.msra.mxu0 0
          %2228 = vmatpush.bf16.msra.mxu0 %v2216
          %2229 = vmatpush.bf16.msra.mxu0 %v2215
          %2230 = vmatmul.bf16.gmra.mxu0 %v2220
          %v2231 = vpop.f32.mrf.mxu0
          %v2232 = vadd.f32 %v2200, %v2231
          %v2233 = vpop.f32.mrf.mxu0
          %v2234 = vadd.f32 %v2201, %v2233
          %2235 = vdwg.mxu0
          %v2236 = vld [vmem:[%s23] sm:$0x1]
          %v2238 = vperm.slane %v2236, 0
          %v2240 = vadd.f32 %v2232, %v2238
          %v2241 = vadd.f32 %v2234, %v2238
          %v2242 = vmax.f32 %v2240, 0.0
          %v2243 = vmax.f32 %v2241, 0.0
          %v2244 = vand.u32 2147483647, %v2240
          %v2245 = vand.u32 2147483647, %v2241
          %v2246 = vsub.f32 0.0, %v2244
          %v2247 = vsub.f32 0.0, %v2245
          %v2248 = vmul.f32 %v2246, 1.442695
          %v2249 = vpow.pop %v2248
          %v2250 = vmul.f32 %v2247, 1.442695
          %v2251 = vpow.pop %v2250
          %v2252 = vadd.f32 %v2249, 1.0
          %v2253 = vadd.f32 %v2251, 1.0
          %v2254 = vlog2.pop %v2252
          %v2255 = vmul.f32 %v2254, 0.6931472
          %v2256 = vlog2.pop %v2253
          %v2257 = vmul.f32 %v2256, 0.6931472
          %v2258 = vadd.f32 %v2242, %v2255
          %v2259 = vadd.f32 %v2243, %v2257
          %v2260 = vsub.f32 %v2258, 0.6931472
          %v2261 = vsub.f32 %v2259, 0.6931472
          %v2262 = vld [vmem:[%s7] sm:$0xff]
          %v2264 = vsel %vm1888, %v2262, 0
          %2266 = vmatpush.msra.mxu0 0.0
          %2267 = vmatpush.msra.mxu0 0.0
          %2268 = vmatpush.msra.mxu0 0.0
          %2269 = vmatpush.msra.mxu0 0.0
          %2270 = vmatpush.msra.mxu0 0.0
          %2271 = vmatpush.msra.mxu0 0.0
          %2272 = vmatpush.msra.mxu0 0.0
          %2273 = vmatpush.msra.mxu0 0.0
          %2274 = vmatpush.msra.mxu0 0.0
          %2275 = vmatpush.msra.mxu0 0.0
          %2276 = vmatpush.msra.mxu0 0.0
          %2277 = vmatpush.msra.mxu0 0.0
          %2278 = vmatpush.msra.mxu0 0.0
          %2279 = vmatpush.msra.mxu0 0.0
          %2280 = vmatpush.msra.mxu0 %v2261
          %2281 = vmatpush.msra.mxu0 %v2260
          %2282 = vmatmul.f32.gmra.mxu0 %v2264
          %v2283 = vpop.f32.mrf.mxu0
          %v2284 = vadd.f32 0.0, %v2283
          %2285 = vdwg.mxu0
          %v2286 = vld [vmem:[%s8] sm:$0xff]
          %v2287 = vld [vmem:[%s25] sm:$0x3]
          %2289 = vset.pattern.permute.xlu0 0
          %2290 = vperm.xlu0 %2289, %v2286
          %v2291 = vpop.permute.xlu0 %2290
          %v2293 = vperm.slane %v2287, 0
          %v2294 = vmul.f32 %v2291, %v2293
          %2295 = vset.pattern.permute.xlu0 1
          %2296 = vperm.xlu0 %2295, %v2286
          %v2297 = vpop.permute.xlu0 %2296
          %v2299 = vperm.slane %v2287, 1
          %v2300 = vmul.f32 %v2297, %v2299
          %v2301 = vadd.f32 %v2294, %v2300
          %v2302 = vpack.c.bf16 %v2284, %v2284
          %v2303 = vld [vmem:[%s24] sm:$0xf]
          %v2304 = vld [vmem:[%s24 + $0x4] sm:$0xf]
          %v2307 = vunpack.c.l.b16 %v2303
          %v2308 = vunpack.c.l.b16 %v2304
          %v2309 = vpack.c.b16 %v2308, %v2307
          %v2312 = vsel %vm1888, %v2302, 0
          %2314 = vmatpush.bf16.msra.mxu0 0
          %2315 = vmatpush.bf16.msra.mxu0 0
          %2316 = vmatpush.bf16.msra.mxu0 0
          %2317 = vmatpush.bf16.msra.mxu0 0
          %2318 = vmatpush.bf16.msra.mxu0 0
          %2319 = vmatpush.bf16.msra.mxu0 0
          %2320 = vmatpush.bf16.msra.mxu0 0
          %2321 = vmatpush.bf16.msra.mxu0 %v2309
          %2322 = vmatmul.bf16.gmra.mxu0 %v2312
          %v2323 = vpop.f32.mrf.mxu0
          %v2324 = vadd.f32 %v2301, %v2323
          %v2325 = vpop.f32.mrf.mxu0
          %2326 = vdwg.mxu0
          %v2327 = vld [vmem:[%s26] sm:$0x1]
          %v2329 = vperm.slane %v2327, 0
          %v2331 = vadd.f32 %v2324, %v2329
          %2332 = vst [vmem:[#allocation6] sm:$0xff] %v2331
        $region185: #{schnet_forward.1} parent=164 // pred_fallthru
          _
        // Predicated region
        $region186: #{schnet_forward.1} parent=164 // pred_check
          %p2333 = pneg %p706
        $region187: #{schnet_forward.1} parent=164 // pred_check_branch
          %2335 = sbr.rel (%p2333) target = $region189
        $region188: #{schnet_forward.1} parent=164 // pred_region
          %2337 = vsyncadd [#allocation7], 0
          %s2339 = sshll.u32 [#allocation6], 4
          %s2340 = int_to_ptr.vmem [resolvable:$true] %s2339
          %s2341 = sshll.u32 %s27, 4
          %s2342 = int_to_ptr.hbm [resolvable:$true] %s2341
          %2344 = dma.vmem_to_hbm [thread:$0]  %s2340, 128, %s2342, [#allocation7]
        $region189: #{schnet_forward.1} parent=164 // pred_fallthru
          _
        // Predicated region
        $region190: #{schnet_forward.1} parent=164 // pred_check
          %p2345 = pneg %p706
        $region191: #{schnet_forward.1} parent=164 // pred_check_branch
          %2347 = sbr.rel (%p2345) target = $region193
        $region192: #{schnet_forward.1} parent=164 // pred_region
          %2349 = dma.done [#allocation7], 128
        $region193: #{schnet_forward.1} parent=164 // pred_fallthru
          _
      $region165: #{schnet_forward.1} parent=5 // pred_fallthru
        _
      %p2350 = scmp.le.s32.totalorder 2, %s34
      // Predicated region
      $region194: #{schnet_forward.1} parent=5 // pred_check
        %p2351 = pneg %p2350
      $region195: #{schnet_forward.1} parent=5 // pred_check_branch
        %2353 = sbr.rel (%p2351) target = $region197
      $region196: #{schnet_forward.1} parent=5 // pred_region
        %s2354 = ssub.s32 %s34, 2
      $region197: #{schnet_forward.1} parent=5 // pred_fallthru
        _
    $region6: #{schnet_forward.1} parent=1 // loop_footer
      %s38 = sadd.s32 1, %s34
    $region7: #{schnet_forward.1} parent=1 // loop_footer_branch
      %33 = sbr.rel target = $region3
    $region8: #{schnet_forward.1} parent=1 // loop_exit
      _
    %2355 = vsyncpa [#allocation7], 1
    %s2356 = scalar_lea.sflag [#allocation7], 1
    %2357 = vsyncpa %s2356, 1

</llo_original>
